<compile_context>
chip_gen: v5e
topology: v5e:2x2
jax: 0.10.0
libtpu: 0.0.40
codegen_flags: <defaults>
</compile_context>

<pallas_src>
import jax
import jax.numpy as jnp
from jax.experimental import pallas as pl
from jax.experimental.pallas import tpu as pltpu  # noqa: F401  (TPU backend)

BN_EPS = 1e-5


def _bn_relu_to_bf16(h, gamma, beta, chunk=256):
    """Training-mode BatchNorm1d + ReLU; f32 math, bf16 output.

    Stats (single-pass sum / sum-of-squares) and the folded
    normalize+affine are computed per `chunk`-lane group so only one chunk's
    h*h temporary is live at a time; each normalized chunk is cast to bf16
    immediately (it feeds the next MXU matmul).
    """
    B, D = h.shape
    inv_n = 1.0 / B
    outs = []
    for c in range(0, D, chunk):
        hc = h[:, c:c + chunk]
        s = jnp.sum(hc, axis=0, keepdims=True)
        sq = jnp.sum(hc * hc, axis=0, keepdims=True)
        mean = s * inv_n
        var = jnp.maximum(sq * inv_n - mean * mean, 0.0)   # clamp: no NaN from rsqrt
        scale = gamma[:, c:c + chunk] * jax.lax.rsqrt(var + BN_EPS)
        shift = beta[:, c:c + chunk] - mean * scale
        outs.append(jnp.maximum(hc * scale + shift, 0.0).astype(jnp.bfloat16))
    return outs[0] if len(outs) == 1 else jnp.concatenate(outs, axis=-1)


def label_predictor_kernel(
    x_ref,
    w1_ref, g1_ref, be1_ref,
    w2_ref, g2_ref, be2_ref,
    w3_ref, b3_ref,
    o_ref,
):
    # ---- Linear(128 -> 1024) + BN + ReLU ----
    # (b1 dropped: pre-BN bias cancels exactly in training-mode BatchNorm.)
    x = x_ref[...].astype(jnp.bfloat16)          # in-kernel cast, hidden under MXU
    h1 = jnp.dot(x, w1_ref[...], preferred_element_type=jnp.float32)
    h1 = _bn_relu_to_bf16(h1, g1_ref[...], be1_ref[...])          # bf16 (B, 1024)

    # ---- Linear(1024 -> 256) + BN + ReLU ----
    h2 = jnp.dot(h1, w2_ref[...], preferred_element_type=jnp.float32)
    h2 = _bn_relu_to_bf16(h2, g2_ref[...], be2_ref[...])          # bf16 (B, 256)

    # ---- Linear(256 -> n_classes), lane-padded to 128 ----
    logits = jnp.dot(h2, w3_ref[...], preferred_element_type=jnp.float32)
    logits = logits + b3_ref[...]
    o_ref[...] = logits.astype(o_ref.dtype)


def prepare_params(params):
    """One-time preprocessing of raw f32 params into kernel-ready form.

    Call once and reuse across forward passes: bf16 matmul weights and a
    lane-padded (multiple of 128) final layer.  Doing this per call costs
    more HBM traffic than the kernel itself moves.
    """
    n_classes = params["w3"].shape[1]
    n_pad = max(128, pl.cdiv(n_classes, 128) * 128)
    return {
        "w1": params["w1"].astype(jnp.bfloat16),
        "w2": params["w2"].astype(jnp.bfloat16),
        "w3": jnp.pad(params["w3"], ((0, 0), (0, n_pad - n_classes))).astype(jnp.bfloat16),
        "b3": jnp.pad(params["b3"], ((0, 0), (0, n_pad - n_classes))),
        "g1": params["g1"], "be1": params["be1"],
        "g2": params["g2"], "be2": params["be2"],
    }


def label_predictor(x, prepared, n_classes):
    """x: (B, 128) float32. prepared: output of prepare_params()."""
    B = x.shape[0]
    n_pad = prepared["w3"].shape[1]

    args = (
        x,
        prepared["w1"], prepared["g1"], prepared["be1"],
        prepared["w2"], prepared["g2"], prepared["be2"],
        prepared["w3"], prepared["b3"],
    )

    flops = 2 * B * (128 * 1024 + 1024 * 256 + 256 * n_pad)
    bytes_accessed = (sum(int(a.size) * a.dtype.itemsize for a in args)
                      + B * n_pad * 4)
    cost = pl.CostEstimate(flops=flops,
                           transcendentals=1024 + 256,      # rsqrt lanes
                           bytes_accessed=bytes_accessed)

    # Single grid point; every operand is a full-array VMEM block
    # (~0.85 MiB of bf16 weights + small activations: trivially fits VMEM,
    # so no batch tiling / pipelining is needed at these sizes).
    full_spec = lambda a: pl.BlockSpec(a.shape, lambda: (0,) * a.ndim)
    out = pl.pallas_call(
        label_predictor_kernel,
        out_shape=jax.ShapeDtypeStruct((B, n_pad), jnp.float32),
        grid=(),
        in_specs=[full_spec(a) for a in args],
        out_specs=pl.BlockSpec((B, n_pad), lambda: (0, 0)),
        cost_estimate=cost,
    )(*args)
    return out[:, :n_classes]


def init_params(key, n_classes=10):
    """Deterministic synthetic init (Kaiming-uniform-like scale), f32.

    b1/b2 are kept for parity with the PyTorch module, but a bias directly
    before training-mode BatchNorm has no effect on the forward output.
    """
    dims = [(128, 1024), (1024, 256), (256, n_classes)]
    ks = jax.random.split(key, 6)
    p = {}
    for i, (din, dout) in enumerate(dims, start=1):
        bound = 1.0 / jnp.sqrt(jnp.float32(din))
        p[f"w{i}"] = jax.random.uniform(
            ks[2 * (i - 1)], (din, dout), jnp.float32, -bound, bound)
        p[f"b{i}"] = jax.random.uniform(
            ks[2 * (i - 1) + 1], (1, dout), jnp.float32, -bound, bound)
    p["g1"] = jnp.ones((1, 1024), jnp.float32)
    p["be1"] = jnp.zeros((1, 1024), jnp.float32)
    p["g2"] = jnp.ones((1, 256), jnp.float32)
    p["be2"] = jnp.zeros((1, 256), jnp.float32)
    return p


def label_predictor_ref(x, params):
    """Pure-JAX reference with the same bf16-MXU / f32-elementwise mix.

    Applies the b1/b2 biases exactly as the PyTorch module would — their
    cancellation under training-mode BN is verified by the tolerance check.
    """
    bf = jnp.bfloat16
    h = jnp.dot(x.astype(bf), params["w1"].astype(bf),
                preferred_element_type=jnp.float32) + params["b1"]
    m, v = jnp.mean(h, 0, keepdims=True), jnp.var(h, 0, keepdims=True)
    h = (h - m) / jnp.sqrt(v + BN_EPS) * params["g1"] + params["be1"]
    h = jnp.maximum(h, 0.0)
    h = jnp.dot(h.astype(bf), params["w2"].astype(bf),
                preferred_element_type=jnp.float32) + params["b2"]
    m, v = jnp.mean(h, 0, keepdims=True), jnp.var(h, 0, keepdims=True)
    h = (h - m) / jnp.sqrt(v + BN_EPS) * params["g2"] + params["be2"]
    h = jnp.maximum(h, 0.0)
    return jnp.dot(h.astype(bf), params["w3"].astype(bf),
                   preferred_element_type=jnp.float32) + params["b3"]


if __name__ == "__main__":
    key = jax.random.PRNGKey(0)
    kx, kp = jax.random.split(key)

    B, IN_DIM, N_CLASSES = 32, 128, 10
    x = jax.random.normal(kx, (B, IN_DIM), jnp.float32)
    params = init_params(kp, n_classes=N_CLASSES)

    prepared = prepare_params(params)          # one-time; reuse across calls
    out = jax.block_until_ready(label_predictor(x, prepared, N_CLASSES))
    ref = label_predictor_ref(x, params)

    assert out.shape == (B, N_CLASSES), out.shape
    max_err = float(jnp.max(jnp.abs(out - ref)))
    assert max_err < 2e-3, max_err

    print("KERNEL_OK")
</pallas_src>

<mosaic_0001>
module attributes {stable_mosaic.version = 11 : i64} {
  func.func @label_predictor_kernel(%arg0: memref<32x128xf32, #tpu.memory_space<vmem>>, %arg1: memref<128x1024xbf16, #tpu.memory_space<vmem>>, %arg2: memref<1x1024xf32, #tpu.memory_space<vmem>>, %arg3: memref<1x1024xf32, #tpu.memory_space<vmem>>, %arg4: memref<1024x256xbf16, #tpu.memory_space<vmem>>, %arg5: memref<1x256xf32, #tpu.memory_space<vmem>>, %arg6: memref<1x256xf32, #tpu.memory_space<vmem>>, %arg7: memref<256x128xbf16, #tpu.memory_space<vmem>>, %arg8: memref<1x128xf32, #tpu.memory_space<vmem>>, %arg9: memref<32x128xf32, #tpu.memory_space<vmem>>) attributes {dimension_semantics = [], scalar_prefetch = 0 : i64, scratch_operands = 0 : i64, tpu.core_type = #tpu.core_type<tc>} {
    %c0 = arith.constant 0 : index
    %c0_0 = arith.constant 0 : index
    %0 = vector.load %arg0[%c0, %c0_0] : memref<32x128xf32, #tpu.memory_space<vmem>>, vector<32x128xf32>
    %1 = arith.truncf %0 : vector<32x128xf32> to vector<32x128xbf16>
    %c0_1 = arith.constant 0 : index
    %c0_2 = arith.constant 0 : index
    %2 = vector.load %arg1[%c0_1, %c0_2] : memref<128x1024xbf16, #tpu.memory_space<vmem>>, vector<128x1024xbf16>
    %cst = arith.constant dense<0.000000e+00> : vector<32x1024xf32>
    %3 = tpu.matmul %1, %2, %cst {dimension_numbers = #tpu.dot_dimension_numbers<[1], [0], [0], [1], [0, 0, 1, 1], [], []>} : vector<32x128xbf16>, vector<128x1024xbf16>, vector<32x1024xf32> -> vector<32x1024xf32>
    %c0_3 = arith.constant 0 : index
    %c0_4 = arith.constant 0 : index
    %4 = vector.load %arg2[%c0_3, %c0_4] : memref<1x1024xf32, #tpu.memory_space<vmem>>, vector<1x1024xf32>
    %c0_5 = arith.constant 0 : index
    %c0_6 = arith.constant 0 : index
    %5 = vector.load %arg3[%c0_5, %c0_6] : memref<1x1024xf32, #tpu.memory_space<vmem>>, vector<1x1024xf32>
    %6 = vector.extract_strided_slice %3 {offsets = [0, 0], sizes = [32, 256], strides = [1, 1]} : vector<32x1024xf32> to vector<32x256xf32>
    %cst_7 = arith.constant dense<0.000000e+00> : vector<256xf32>
    %7 = vector.multi_reduction <add>, %6, %cst_7 [0] : vector<32x256xf32> to vector<256xf32>
    %8 = vector.shape_cast %7 : vector<256xf32> to vector<1x256xf32>
    %9 = arith.mulf %6, %6 : vector<32x256xf32>
    %cst_8 = arith.constant dense<0.000000e+00> : vector<256xf32>
    %10 = vector.multi_reduction <add>, %9, %cst_8 [0] : vector<32x256xf32> to vector<256xf32>
    %11 = vector.shape_cast %10 : vector<256xf32> to vector<1x256xf32>
    %cst_9 = arith.constant 3.125000e-02 : f32
    %12 = vector.broadcast %cst_9 : f32 to vector<1x256xf32>
    %13 = arith.mulf %8, %12 : vector<1x256xf32>
    %cst_10 = arith.constant 3.125000e-02 : f32
    %14 = vector.broadcast %cst_10 : f32 to vector<1x256xf32>
    %15 = arith.mulf %11, %14 : vector<1x256xf32>
    %16 = arith.mulf %13, %13 : vector<1x256xf32>
    %17 = arith.subf %15, %16 : vector<1x256xf32>
    %cst_11 = arith.constant 0.000000e+00 : f32
    %18 = vector.broadcast %cst_11 : f32 to vector<1x256xf32>
    %19 = arith.maximumf %17, %18 : vector<1x256xf32>
    %20 = vector.extract_strided_slice %4 {offsets = [0, 0], sizes = [1, 256], strides = [1, 1]} : vector<1x1024xf32> to vector<1x256xf32>
    %cst_12 = arith.constant 9.99999974E-6 : f32
    %21 = vector.broadcast %cst_12 : f32 to vector<1x256xf32>
    %22 = arith.addf %19, %21 : vector<1x256xf32>
    %23 = math.rsqrt %22 : vector<1x256xf32>
    %24 = arith.mulf %20, %23 : vector<1x256xf32>
    %25 = vector.extract_strided_slice %5 {offsets = [0, 0], sizes = [1, 256], strides = [1, 1]} : vector<1x1024xf32> to vector<1x256xf32>
    %26 = arith.mulf %13, %24 : vector<1x256xf32>
    %27 = arith.subf %25, %26 : vector<1x256xf32>
    %28 = vector.broadcast %24 : vector<1x256xf32> to vector<32x256xf32>
    %29 = arith.mulf %6, %28 : vector<32x256xf32>
    %30 = vector.broadcast %27 : vector<1x256xf32> to vector<32x256xf32>
    %31 = arith.addf %29, %30 : vector<32x256xf32>
    %cst_13 = arith.constant 0.000000e+00 : f32
    %32 = vector.broadcast %cst_13 : f32 to vector<32x256xf32>
    %33 = arith.maximumf %31, %32 : vector<32x256xf32>
    %34 = arith.truncf %33 : vector<32x256xf32> to vector<32x256xbf16>
    %35 = vector.extract_strided_slice %3 {offsets = [0, 256], sizes = [32, 256], strides = [1, 1]} : vector<32x1024xf32> to vector<32x256xf32>
    %cst_14 = arith.constant dense<0.000000e+00> : vector<256xf32>
    %36 = vector.multi_reduction <add>, %35, %cst_14 [0] : vector<32x256xf32> to vector<256xf32>
    %37 = vector.shape_cast %36 : vector<256xf32> to vector<1x256xf32>
    %38 = arith.mulf %35, %35 : vector<32x256xf32>
    %cst_15 = arith.constant dense<0.000000e+00> : vector<256xf32>
    %39 = vector.multi_reduction <add>, %38, %cst_15 [0] : vector<32x256xf32> to vector<256xf32>
    %40 = vector.shape_cast %39 : vector<256xf32> to vector<1x256xf32>
    %cst_16 = arith.constant 3.125000e-02 : f32
    %41 = vector.broadcast %cst_16 : f32 to vector<1x256xf32>
    %42 = arith.mulf %37, %41 : vector<1x256xf32>
    %cst_17 = arith.constant 3.125000e-02 : f32
    %43 = vector.broadcast %cst_17 : f32 to vector<1x256xf32>
    %44 = arith.mulf %40, %43 : vector<1x256xf32>
    %45 = arith.mulf %42, %42 : vector<1x256xf32>
    %46 = arith.subf %44, %45 : vector<1x256xf32>
    %cst_18 = arith.constant 0.000000e+00 : f32
    %47 = vector.broadcast %cst_18 : f32 to vector<1x256xf32>
    %48 = arith.maximumf %46, %47 : vector<1x256xf32>
    %49 = vector.extract_strided_slice %4 {offsets = [0, 256], sizes = [1, 256], strides = [1, 1]} : vector<1x1024xf32> to vector<1x256xf32>
    %cst_19 = arith.constant 9.99999974E-6 : f32
    %50 = vector.broadcast %cst_19 : f32 to vector<1x256xf32>
    %51 = arith.addf %48, %50 : vector<1x256xf32>
    %52 = math.rsqrt %51 : vector<1x256xf32>
    %53 = arith.mulf %49, %52 : vector<1x256xf32>
    %54 = vector.extract_strided_slice %5 {offsets = [0, 256], sizes = [1, 256], strides = [1, 1]} : vector<1x1024xf32> to vector<1x256xf32>
    %55 = arith.mulf %42, %53 : vector<1x256xf32>
    %56 = arith.subf %54, %55 : vector<1x256xf32>
    %57 = vector.broadcast %53 : vector<1x256xf32> to vector<32x256xf32>
    %58 = arith.mulf %35, %57 : vector<32x256xf32>
    %59 = vector.broadcast %56 : vector<1x256xf32> to vector<32x256xf32>
    %60 = arith.addf %58, %59 : vector<32x256xf32>
    %cst_20 = arith.constant 0.000000e+00 : f32
    %61 = vector.broadcast %cst_20 : f32 to vector<32x256xf32>
    %62 = arith.maximumf %60, %61 : vector<32x256xf32>
    %63 = arith.truncf %62 : vector<32x256xf32> to vector<32x256xbf16>
    %64 = vector.extract_strided_slice %3 {offsets = [0, 512], sizes = [32, 256], strides = [1, 1]} : vector<32x1024xf32> to vector<32x256xf32>
    %cst_21 = arith.constant dense<0.000000e+00> : vector<256xf32>
    %65 = vector.multi_reduction <add>, %64, %cst_21 [0] : vector<32x256xf32> to vector<256xf32>
    %66 = vector.shape_cast %65 : vector<256xf32> to vector<1x256xf32>
    %67 = arith.mulf %64, %64 : vector<32x256xf32>
    %cst_22 = arith.constant dense<0.000000e+00> : vector<256xf32>
    %68 = vector.multi_reduction <add>, %67, %cst_22 [0] : vector<32x256xf32> to vector<256xf32>
    %69 = vector.shape_cast %68 : vector<256xf32> to vector<1x256xf32>
    %cst_23 = arith.constant 3.125000e-02 : f32
    %70 = vector.broadcast %cst_23 : f32 to vector<1x256xf32>
    %71 = arith.mulf %66, %70 : vector<1x256xf32>
    %cst_24 = arith.constant 3.125000e-02 : f32
    %72 = vector.broadcast %cst_24 : f32 to vector<1x256xf32>
    %73 = arith.mulf %69, %72 : vector<1x256xf32>
    %74 = arith.mulf %71, %71 : vector<1x256xf32>
    %75 = arith.subf %73, %74 : vector<1x256xf32>
    %cst_25 = arith.constant 0.000000e+00 : f32
    %76 = vector.broadcast %cst_25 : f32 to vector<1x256xf32>
    %77 = arith.maximumf %75, %76 : vector<1x256xf32>
    %78 = vector.extract_strided_slice %4 {offsets = [0, 512], sizes = [1, 256], strides = [1, 1]} : vector<1x1024xf32> to vector<1x256xf32>
    %cst_26 = arith.constant 9.99999974E-6 : f32
    %79 = vector.broadcast %cst_26 : f32 to vector<1x256xf32>
    %80 = arith.addf %77, %79 : vector<1x256xf32>
    %81 = math.rsqrt %80 : vector<1x256xf32>
    %82 = arith.mulf %78, %81 : vector<1x256xf32>
    %83 = vector.extract_strided_slice %5 {offsets = [0, 512], sizes = [1, 256], strides = [1, 1]} : vector<1x1024xf32> to vector<1x256xf32>
    %84 = arith.mulf %71, %82 : vector<1x256xf32>
    %85 = arith.subf %83, %84 : vector<1x256xf32>
    %86 = vector.broadcast %82 : vector<1x256xf32> to vector<32x256xf32>
    %87 = arith.mulf %64, %86 : vector<32x256xf32>
    %88 = vector.broadcast %85 : vector<1x256xf32> to vector<32x256xf32>
    %89 = arith.addf %87, %88 : vector<32x256xf32>
    %cst_27 = arith.constant 0.000000e+00 : f32
    %90 = vector.broadcast %cst_27 : f32 to vector<32x256xf32>
    %91 = arith.maximumf %89, %90 : vector<32x256xf32>
    %92 = arith.truncf %91 : vector<32x256xf32> to vector<32x256xbf16>
    %93 = vector.extract_strided_slice %3 {offsets = [0, 768], sizes = [32, 256], strides = [1, 1]} : vector<32x1024xf32> to vector<32x256xf32>
    %cst_28 = arith.constant dense<0.000000e+00> : vector<256xf32>
    %94 = vector.multi_reduction <add>, %93, %cst_28 [0] : vector<32x256xf32> to vector<256xf32>
    %95 = vector.shape_cast %94 : vector<256xf32> to vector<1x256xf32>
    %96 = arith.mulf %93, %93 : vector<32x256xf32>
    %cst_29 = arith.constant dense<0.000000e+00> : vector<256xf32>
    %97 = vector.multi_reduction <add>, %96, %cst_29 [0] : vector<32x256xf32> to vector<256xf32>
    %98 = vector.shape_cast %97 : vector<256xf32> to vector<1x256xf32>
    %cst_30 = arith.constant 3.125000e-02 : f32
    %99 = vector.broadcast %cst_30 : f32 to vector<1x256xf32>
    %100 = arith.mulf %95, %99 : vector<1x256xf32>
    %cst_31 = arith.constant 3.125000e-02 : f32
    %101 = vector.broadcast %cst_31 : f32 to vector<1x256xf32>
    %102 = arith.mulf %98, %101 : vector<1x256xf32>
    %103 = arith.mulf %100, %100 : vector<1x256xf32>
    %104 = arith.subf %102, %103 : vector<1x256xf32>
    %cst_32 = arith.constant 0.000000e+00 : f32
    %105 = vector.broadcast %cst_32 : f32 to vector<1x256xf32>
    %106 = arith.maximumf %104, %105 : vector<1x256xf32>
    %107 = vector.extract_strided_slice %4 {offsets = [0, 768], sizes = [1, 256], strides = [1, 1]} : vector<1x1024xf32> to vector<1x256xf32>
    %cst_33 = arith.constant 9.99999974E-6 : f32
    %108 = vector.broadcast %cst_33 : f32 to vector<1x256xf32>
    %109 = arith.addf %106, %108 : vector<1x256xf32>
    %110 = math.rsqrt %109 : vector<1x256xf32>
    %111 = arith.mulf %107, %110 : vector<1x256xf32>
    %112 = vector.extract_strided_slice %5 {offsets = [0, 768], sizes = [1, 256], strides = [1, 1]} : vector<1x1024xf32> to vector<1x256xf32>
    %113 = arith.mulf %100, %111 : vector<1x256xf32>
    %114 = arith.subf %112, %113 : vector<1x256xf32>
    %115 = vector.broadcast %111 : vector<1x256xf32> to vector<32x256xf32>
    %116 = arith.mulf %93, %115 : vector<32x256xf32>
    %117 = vector.broadcast %114 : vector<1x256xf32> to vector<32x256xf32>
    %118 = arith.addf %116, %117 : vector<32x256xf32>
    %cst_34 = arith.constant 0.000000e+00 : f32
    %119 = vector.broadcast %cst_34 : f32 to vector<32x256xf32>
    %120 = arith.maximumf %118, %119 : vector<32x256xf32>
    %121 = arith.truncf %120 : vector<32x256xf32> to vector<32x256xbf16>
    %122 = tpu.concatenate %34, %63, %92, %121 in 1 : vector<32x256xbf16>, vector<32x256xbf16>, vector<32x256xbf16>, vector<32x256xbf16> -> vector<32x1024xbf16>
    %c0_35 = arith.constant 0 : index
    %c0_36 = arith.constant 0 : index
    %123 = vector.load %arg4[%c0_35, %c0_36] : memref<1024x256xbf16, #tpu.memory_space<vmem>>, vector<1024x256xbf16>
    %cst_37 = arith.constant dense<0.000000e+00> : vector<32x256xf32>
    %124 = tpu.matmul %122, %123, %cst_37 {dimension_numbers = #tpu.dot_dimension_numbers<[1], [0], [0], [1], [0, 0, 1, 1], [], []>} : vector<32x1024xbf16>, vector<1024x256xbf16>, vector<32x256xf32> -> vector<32x256xf32>
    %c0_38 = arith.constant 0 : index
    %c0_39 = arith.constant 0 : index
    %125 = vector.load %arg5[%c0_38, %c0_39] : memref<1x256xf32, #tpu.memory_space<vmem>>, vector<1x256xf32>
    %c0_40 = arith.constant 0 : index
    %c0_41 = arith.constant 0 : index
    %126 = vector.load %arg6[%c0_40, %c0_41] : memref<1x256xf32, #tpu.memory_space<vmem>>, vector<1x256xf32>
    %cst_42 = arith.constant dense<0.000000e+00> : vector<256xf32>
    %127 = vector.multi_reduction <add>, %124, %cst_42 [0] : vector<32x256xf32> to vector<256xf32>
    %128 = vector.shape_cast %127 : vector<256xf32> to vector<1x256xf32>
    %129 = arith.mulf %124, %124 : vector<32x256xf32>
    %cst_43 = arith.constant dense<0.000000e+00> : vector<256xf32>
    %130 = vector.multi_reduction <add>, %129, %cst_43 [0] : vector<32x256xf32> to vector<256xf32>
    %131 = vector.shape_cast %130 : vector<256xf32> to vector<1x256xf32>
    %cst_44 = arith.constant 3.125000e-02 : f32
    %132 = vector.broadcast %cst_44 : f32 to vector<1x256xf32>
    %133 = arith.mulf %128, %132 : vector<1x256xf32>
    %cst_45 = arith.constant 3.125000e-02 : f32
    %134 = vector.broadcast %cst_45 : f32 to vector<1x256xf32>
    %135 = arith.mulf %131, %134 : vector<1x256xf32>
    %136 = arith.mulf %133, %133 : vector<1x256xf32>
    %137 = arith.subf %135, %136 : vector<1x256xf32>
    %cst_46 = arith.constant 0.000000e+00 : f32
    %138 = vector.broadcast %cst_46 : f32 to vector<1x256xf32>
    %139 = arith.maximumf %137, %138 : vector<1x256xf32>
    %cst_47 = arith.constant 9.99999974E-6 : f32
    %140 = vector.broadcast %cst_47 : f32 to vector<1x256xf32>
    %141 = arith.addf %139, %140 : vector<1x256xf32>
    %142 = math.rsqrt %141 : vector<1x256xf32>
    %143 = arith.mulf %125, %142 : vector<1x256xf32>
    %144 = arith.mulf %133, %143 : vector<1x256xf32>
    %145 = arith.subf %126, %144 : vector<1x256xf32>
    %146 = vector.broadcast %143 : vector<1x256xf32> to vector<32x256xf32>
    %147 = arith.mulf %124, %146 : vector<32x256xf32>
    %148 = vector.broadcast %145 : vector<1x256xf32> to vector<32x256xf32>
    %149 = arith.addf %147, %148 : vector<32x256xf32>
    %cst_48 = arith.constant 0.000000e+00 : f32
    %150 = vector.broadcast %cst_48 : f32 to vector<32x256xf32>
    %151 = arith.maximumf %149, %150 : vector<32x256xf32>
    %152 = arith.truncf %151 : vector<32x256xf32> to vector<32x256xbf16>
    %c0_49 = arith.constant 0 : index
    %c0_50 = arith.constant 0 : index
    %153 = vector.load %arg7[%c0_49, %c0_50] : memref<256x128xbf16, #tpu.memory_space<vmem>>, vector<256x128xbf16>
    %cst_51 = arith.constant dense<0.000000e+00> : vector<32x128xf32>
    %154 = tpu.matmul %152, %153, %cst_51 {dimension_numbers = #tpu.dot_dimension_numbers<[1], [0], [0], [1], [0, 0, 1, 1], [], []>} : vector<32x256xbf16>, vector<256x128xbf16>, vector<32x128xf32> -> vector<32x128xf32>
    %c0_52 = arith.constant 0 : index
    %c0_53 = arith.constant 0 : index
    %155 = vector.load %arg8[%c0_52, %c0_53] : memref<1x128xf32, #tpu.memory_space<vmem>>, vector<1x128xf32>
    %156 = vector.broadcast %155 : vector<1x128xf32> to vector<32x128xf32>
    %157 = arith.addf %154, %156 : vector<32x128xf32>
    %c0_54 = arith.constant 0 : index
    %c0_55 = arith.constant 0 : index
    %158 = vector.load %arg9[%c0_54, %c0_55] : memref<32x128xf32, #tpu.memory_space<vmem>>, vector<32x128xf32>
    tpu.vector_store %arg9[%c0_54, %c0_55], %157 {strides = array<i32>} : memref<32x128xf32, #tpu.memory_space<vmem>>, vector<32x128xf32>,
    return
  }
}

</mosaic_0001>

<llo_original>
// kernel: tpu_custom_call.1
$region0: #{tpu_custom_call.1}
  #allocation0 [shape = 'u32[]', space=smem, size = 0x4, offset = 0x4, fixed_abs, tag = 'smem constant byte address 0x4 - core index']
  #allocation1 [shape = 'u32[72,128]{1,0:T(1,128)}', space=vmem, size = 0x9000, scoped, tag = 'internal scratch']
  %s0 = inlined_call_operand.hbm [shape: f32[32,128], index: 0, kind: input, shape index: {}]
  %s1 = inlined_call_operand.hbm [shape: bf16[128,1024], index: 1, kind: input, shape index: {}]
  %s2 = inlined_call_operand.hbm [shape: f32[1,1024], index: 2, kind: input, shape index: {}]
  %s3 = inlined_call_operand.hbm [shape: f32[1,1024], index: 3, kind: input, shape index: {}]
  %s4 = inlined_call_operand.hbm [shape: bf16[1024,256], index: 4, kind: input, shape index: {}]
  %s5 = inlined_call_operand.vmem [shape: f32[1,256], index: 5, kind: input, shape index: {}]
  %s6 = inlined_call_operand.vmem [shape: f32[1,256], index: 6, kind: input, shape index: {}]
  %s7 = inlined_call_operand.hbm [shape: bf16[256,128], index: 7, kind: input, shape index: {}]
  %s8 = inlined_call_operand.vmem [shape: f32[1,128], index: 8, kind: input, shape index: {}]
  %s9 = inlined_call_operand.hbm [shape: f32[32,128], index: 9, kind: output, shape index: {}]
  %s10 = sld [smem:[#allocation0]]
  $region70: #{tpu_custom_call.1} parent=0
    _
  %s12 = ssub.s32 1, %s10
  %s13 = scalar_select 0, %s12, %s10
  $region1: #{tpu_custom_call.1} parent=0
    #allocation2 [shape = 'u8[16384]{0}', space=vmem, size = 0x4000, scoped, tag = 'input window, operand 0, single buffered']
    #allocation3 [shape = 's32[1]{0}', space=sflag, size = 0x4, scoped, tag = 'scoped memory for tpu_custom_call.1']
    #allocation4 [shape = 's32[1]{0}', space=sflag, size = 0x4, scoped, tag = 'scoped memory for tpu_custom_call.1']
    #allocation5 [shape = 'u8[262144]{0}', space=vmem, size = 0x40000, scoped, tag = 'input window, operand 1, single buffered']
    #allocation6 [shape = 's32[1]{0}', space=sflag, size = 0x4, scoped, tag = 'scoped memory for tpu_custom_call.1']
    #allocation7 [shape = 'u8[4096]{0}', space=vmem, size = 0x1000, scoped, tag = 'input window, operand 2, single buffered']
    #allocation8 [shape = 'u8[4096]{0}', space=vmem, size = 0x1000, scoped, tag = 'input window, operand 3, single buffered']
    #allocation9 [shape = 's32[1]{0}', space=sflag, size = 0x4, scoped, tag = 'scoped memory for tpu_custom_call.1']
    #allocation10 [shape = 'u8[524288]{0}', space=vmem, size = 0x80000, scoped, tag = 'input window, operand 4, single buffered']
    #allocation11 [shape = 'u8[65536]{0}', space=vmem, size = 0x10000, scoped, tag = 'input window, operand 7, single buffered']
    #allocation12 [shape = 's32[1]{0}', space=sflag, size = 0x4, scoped, tag = 'scoped memory for tpu_custom_call.1']
    #allocation13 [shape = 'u8[16384]{0}', space=vmem, size = 0x4000, scoped, tag = 'output window, operand 0, single buffered']
    %14 = vsyncpa [#allocation3], 0
    %15 = vsyncpa [#allocation6], 0
    %16 = vsyncpa [#allocation9], 0
    %17 = vsyncpa [#allocation12], 0
    %18 = vsyncpa [#allocation4], 0
    // Predicated region
    $region2: #{tpu_custom_call.1} parent=1 // pred_check
      _
    $region3: #{tpu_custom_call.1} parent=1 // pred_check_branch
      %20 = sbr.rel (0) target = $region5
    $region4: #{tpu_custom_call.1} parent=1 // pred_region
      %22 = vsyncadd [#allocation3], 0
      %s23 = sshll.u32 %s0, 4
      %s24 = int_to_ptr.hbm [resolvable:$true] %s23
      %s25 = sshll.u32 [#allocation2], 4
      %s26 = int_to_ptr.vmem [resolvable:$true] %s25
      %31 = dma.hbm_to_vmem [thread:$0]  %s24, 512, %s26, [#allocation3], 128, 128, 8
    $region5: #{tpu_custom_call.1} parent=1 // pred_fallthru
      _
    // Predicated region
    $region6: #{tpu_custom_call.1} parent=1 // pred_check
      _
    $region7: #{tpu_custom_call.1} parent=1 // pred_check_branch
      %33 = sbr.rel (0) target = $region9
    $region8: #{tpu_custom_call.1} parent=1 // pred_region
      %35 = vsyncadd [#allocation6], 0
      %s36 = sshll.u32 %s1, 4
      %s37 = int_to_ptr.hbm [resolvable:$true] %s36
      %s38 = sshll.u32 [#allocation5], 4
      %s39 = int_to_ptr.vmem [resolvable:$true] %s38
      %44 = dma.hbm_to_vmem [thread:$0]  %s37, 8192, %s39, [#allocation6], 512, 512, 32
    $region9: #{tpu_custom_call.1} parent=1 // pred_fallthru
      _
    // Predicated region
    $region10: #{tpu_custom_call.1} parent=1 // pred_check
      _
    $region11: #{tpu_custom_call.1} parent=1 // pred_check_branch
      %46 = sbr.rel (0) target = $region13
    $region12: #{tpu_custom_call.1} parent=1 // pred_region
      %48 = vsyncadd [#allocation6], 0
      %s50 = sshll.u32 %s2, 4
      %s51 = int_to_ptr.hbm [resolvable:$true] %s50
      %s52 = sshll.u32 [#allocation7], 4
      %s53 = int_to_ptr.vmem [resolvable:$true] %s52
      %55 = dma.hbm_to_vmem [thread:$0]  %s51, 128, %s53, [#allocation6]
    $region13: #{tpu_custom_call.1} parent=1 // pred_fallthru
      _
    // Predicated region
    $region14: #{tpu_custom_call.1} parent=1 // pred_check
      _
    $region15: #{tpu_custom_call.1} parent=1 // pred_check_branch
      %57 = sbr.rel (0) target = $region17
    $region16: #{tpu_custom_call.1} parent=1 // pred_region
      %59 = vsyncadd [#allocation9], 0
      %s61 = sshll.u32 %s3, 4
      %s62 = int_to_ptr.hbm [resolvable:$true] %s61
      %s63 = sshll.u32 [#allocation8], 4
      %s64 = int_to_ptr.vmem [resolvable:$true] %s63
      %66 = dma.hbm_to_vmem [thread:$0]  %s62, 128, %s64, [#allocation9]
    $region17: #{tpu_custom_call.1} parent=1 // pred_fallthru
      _
    // Predicated region
    $region18: #{tpu_custom_call.1} parent=1 // pred_check
      _
    $region19: #{tpu_custom_call.1} parent=1 // pred_check_branch
      %68 = sbr.rel (0) target = $region21
    $region20: #{tpu_custom_call.1} parent=1 // pred_region
      %70 = vsyncadd [#allocation9], 0
      %s71 = sshll.u32 %s4, 4
      %s72 = int_to_ptr.hbm [resolvable:$true] %s71
      %s73 = sshll.u32 [#allocation10], 4
      %s74 = int_to_ptr.vmem [resolvable:$true] %s73
      %79 = dma.hbm_to_vmem [thread:$0]  %s72, 16384, %s74, [#allocation9], 128, 128, 8
    $region21: #{tpu_custom_call.1} parent=1 // pred_fallthru
      _
    // Predicated region
    $region22: #{tpu_custom_call.1} parent=1 // pred_check
      _
    $region23: #{tpu_custom_call.1} parent=1 // pred_check_branch
      %81 = sbr.rel (0) target = $region25
    $region24: #{tpu_custom_call.1} parent=1 // pred_region
      _
    $region25: #{tpu_custom_call.1} parent=1 // pred_fallthru
      _
    // Predicated region
    $region26: #{tpu_custom_call.1} parent=1 // pred_check
      _
    $region27: #{tpu_custom_call.1} parent=1 // pred_check_branch
      %83 = sbr.rel (0) target = $region29
    $region28: #{tpu_custom_call.1} parent=1 // pred_region
      _
    $region29: #{tpu_custom_call.1} parent=1 // pred_fallthru
      _
    // Predicated region
    $region30: #{tpu_custom_call.1} parent=1 // pred_check
      _
    $region31: #{tpu_custom_call.1} parent=1 // pred_check_branch
      %85 = sbr.rel (0) target = $region33
    $region32: #{tpu_custom_call.1} parent=1 // pred_region
      %87 = vsyncadd [#allocation12], 0
      %s88 = sshll.u32 %s7, 4
      %s89 = int_to_ptr.hbm [resolvable:$true] %s88
      %s90 = sshll.u32 [#allocation11], 4
      %s91 = int_to_ptr.vmem [resolvable:$true] %s90
      %96 = dma.hbm_to_vmem [thread:$0]  %s89, 2048, %s91, [#allocation12], 64, 64, 4
    $region33: #{tpu_custom_call.1} parent=1 // pred_fallthru
      _
    // Predicated region
    $region34: #{tpu_custom_call.1} parent=1 // pred_check
      _
    $region35: #{tpu_custom_call.1} parent=1 // pred_check_branch
      %98 = sbr.rel (0) target = $region37
    $region36: #{tpu_custom_call.1} parent=1 // pred_region
      _
    $region37: #{tpu_custom_call.1} parent=1 // pred_fallthru
      _
    // Predicated region
    $region38: #{tpu_custom_call.1} parent=1 // pred_check
      _
    $region39: #{tpu_custom_call.1} parent=1 // pred_check_branch
      %100 = sbr.rel (0) target = $region41
    $region40: #{tpu_custom_call.1} parent=1 // pred_region
      %102 = dma.done [#allocation3], 512
    $region41: #{tpu_custom_call.1} parent=1 // pred_fallthru
      _
    // Predicated region
    $region42: #{tpu_custom_call.1} parent=1 // pred_check
      _
    $region43: #{tpu_custom_call.1} parent=1 // pred_check_branch
      %104 = sbr.rel (0) target = $region45
    $region44: #{tpu_custom_call.1} parent=1 // pred_region
      %106 = dma.done [#allocation6], 8192
    $region45: #{tpu_custom_call.1} parent=1 // pred_fallthru
      _
    // Predicated region
    $region46: #{tpu_custom_call.1} parent=1 // pred_check
      _
    $region47: #{tpu_custom_call.1} parent=1 // pred_check_branch
      %108 = sbr.rel (0) target = $region49
    $region48: #{tpu_custom_call.1} parent=1 // pred_region
      %110 = dma.done [#allocation6], 128
    $region49: #{tpu_custom_call.1} parent=1 // pred_fallthru
      _
    // Predicated region
    $region50: #{tpu_custom_call.1} parent=1 // pred_check
      _
    $region51: #{tpu_custom_call.1} parent=1 // pred_check_branch
      %112 = sbr.rel (0) target = $region53
    $region52: #{tpu_custom_call.1} parent=1 // pred_region
      %114 = dma.done [#allocation9], 128
    $region53: #{tpu_custom_call.1} parent=1 // pred_fallthru
      _
    // Predicated region
    $region54: #{tpu_custom_call.1} parent=1 // pred_check
      _
    $region55: #{tpu_custom_call.1} parent=1 // pred_check_branch
      %116 = sbr.rel (0) target = $region57
    $region56: #{tpu_custom_call.1} parent=1 // pred_region
      %118 = dma.done [#allocation9], 16384
    $region57: #{tpu_custom_call.1} parent=1 // pred_fallthru
      _
    // Predicated region
    $region58: #{tpu_custom_call.1} parent=1 // pred_check
      _
    $region59: #{tpu_custom_call.1} parent=1 // pred_check_branch
      %120 = sbr.rel (0) target = $region61
    $region60: #{tpu_custom_call.1} parent=1 // pred_region
      %122 = dma.done [#allocation12], 2048
    $region61: #{tpu_custom_call.1} parent=1 // pred_fallthru
      _
    %v123 = vld [vmem:[#allocation2] sm:$0xff]
    %v124 = vld [vmem:[#allocation2 + $0x8] sm:$0xff]
    %v125 = vld [vmem:[#allocation2 + $0x10] sm:$0xff]
    %v126 = vld [vmem:[#allocation2 + $0x18] sm:$0xff]
    %v127 = vpack.c.bf16 %v124, %v123
    %v128 = vpack.c.bf16 %v126, %v125
    %v129 = vld [vmem:[#allocation5] sm:$0xff]
    %v130 = vld [vmem:[#allocation5 + $0x8] sm:$0xff]
    %v131 = vld [vmem:[#allocation5 + $0x10] sm:$0xff]
    %v132 = vld [vmem:[#allocation5 + $0x18] sm:$0xff]
    %v133 = vld [vmem:[#allocation5 + $0x20] sm:$0xff]
    %v134 = vld [vmem:[#allocation5 + $0x28] sm:$0xff]
    %v135 = vld [vmem:[#allocation5 + $0x30] sm:$0xff]
    %v136 = vld [vmem:[#allocation5 + $0x38] sm:$0xff]
    %v137 = vld [vmem:[#allocation5 + $0x40] sm:$0xff]
    %v138 = vld [vmem:[#allocation5 + $0x48] sm:$0xff]
    %v139 = vld [vmem:[#allocation5 + $0x50] sm:$0xff]
    %v140 = vld [vmem:[#allocation5 + $0x58] sm:$0xff]
    %v141 = vld [vmem:[#allocation5 + $0x60] sm:$0xff]
    %v142 = vld [vmem:[#allocation5 + $0x68] sm:$0xff]
    %v143 = vld [vmem:[#allocation5 + $0x70] sm:$0xff]
    %v144 = vld [vmem:[#allocation5 + $0x78] sm:$0xff]
    %v145 = vld [vmem:[#allocation5 + $0x80] sm:$0xff]
    %v146 = vld [vmem:[#allocation5 + $0x88] sm:$0xff]
    %v147 = vld [vmem:[#allocation5 + $0x90] sm:$0xff]
    %v148 = vld [vmem:[#allocation5 + $0x98] sm:$0xff]
    %v149 = vld [vmem:[#allocation5 + $0xa0] sm:$0xff]
    %v150 = vld [vmem:[#allocation5 + $0xa8] sm:$0xff]
    %v151 = vld [vmem:[#allocation5 + $0xb0] sm:$0xff]
    %v152 = vld [vmem:[#allocation5 + $0xb8] sm:$0xff]
    %v153 = vld [vmem:[#allocation5 + $0xc0] sm:$0xff]
    %v154 = vld [vmem:[#allocation5 + $0xc8] sm:$0xff]
    %v155 = vld [vmem:[#allocation5 + $0xd0] sm:$0xff]
    %v156 = vld [vmem:[#allocation5 + $0xd8] sm:$0xff]
    %v157 = vld [vmem:[#allocation5 + $0xe0] sm:$0xff]
    %v158 = vld [vmem:[#allocation5 + $0xe8] sm:$0xff]
    %v159 = vld [vmem:[#allocation5 + $0xf0] sm:$0xff]
    %v160 = vld [vmem:[#allocation5 + $0xf8] sm:$0xff]
    %v161 = vld [vmem:[#allocation5 + $0x100] sm:$0xff]
    %v162 = vld [vmem:[#allocation5 + $0x108] sm:$0xff]
    %v163 = vld [vmem:[#allocation5 + $0x110] sm:$0xff]
    %v164 = vld [vmem:[#allocation5 + $0x118] sm:$0xff]
    %v165 = vld [vmem:[#allocation5 + $0x120] sm:$0xff]
    %v166 = vld [vmem:[#allocation5 + $0x128] sm:$0xff]
    %v167 = vld [vmem:[#allocation5 + $0x130] sm:$0xff]
    %v168 = vld [vmem:[#allocation5 + $0x138] sm:$0xff]
    %v169 = vld [vmem:[#allocation5 + $0x140] sm:$0xff]
    %v170 = vld [vmem:[#allocation5 + $0x148] sm:$0xff]
    %v171 = vld [vmem:[#allocation5 + $0x150] sm:$0xff]
    %v172 = vld [vmem:[#allocation5 + $0x158] sm:$0xff]
    %v173 = vld [vmem:[#allocation5 + $0x160] sm:$0xff]
    %v174 = vld [vmem:[#allocation5 + $0x168] sm:$0xff]
    %v175 = vld [vmem:[#allocation5 + $0x170] sm:$0xff]
    %v176 = vld [vmem:[#allocation5 + $0x178] sm:$0xff]
    %v177 = vld [vmem:[#allocation5 + $0x180] sm:$0xff]
    %v178 = vld [vmem:[#allocation5 + $0x188] sm:$0xff]
    %v179 = vld [vmem:[#allocation5 + $0x190] sm:$0xff]
    %v180 = vld [vmem:[#allocation5 + $0x198] sm:$0xff]
    %v181 = vld [vmem:[#allocation5 + $0x1a0] sm:$0xff]
    %v182 = vld [vmem:[#allocation5 + $0x1a8] sm:$0xff]
    %v183 = vld [vmem:[#allocation5 + $0x1b0] sm:$0xff]
    %v184 = vld [vmem:[#allocation5 + $0x1b8] sm:$0xff]
    %v185 = vld [vmem:[#allocation5 + $0x1c0] sm:$0xff]
    %v186 = vld [vmem:[#allocation5 + $0x1c8] sm:$0xff]
    %v187 = vld [vmem:[#allocation5 + $0x1d0] sm:$0xff]
    %v188 = vld [vmem:[#allocation5 + $0x1d8] sm:$0xff]
    %v189 = vld [vmem:[#allocation5 + $0x1e0] sm:$0xff]
    %v190 = vld [vmem:[#allocation5 + $0x1e8] sm:$0xff]
    %v191 = vld [vmem:[#allocation5 + $0x1f0] sm:$0xff]
    %v192 = vld [vmem:[#allocation5 + $0x1f8] sm:$0xff]
    %v257 = vunpack.c.l.b16 %v129
    %v258 = vunpack.c.h.b16 %v129
    %v259 = vunpack.c.l.b16 %v130
    %v260 = vunpack.c.h.b16 %v130
    %v261 = vunpack.c.l.b16 %v131
    %v262 = vunpack.c.h.b16 %v131
    %v263 = vunpack.c.l.b16 %v132
    %v264 = vunpack.c.h.b16 %v132
    %v265 = vunpack.c.l.b16 %v133
    %v266 = vunpack.c.h.b16 %v133
    %v267 = vunpack.c.l.b16 %v134
    %v268 = vunpack.c.h.b16 %v134
    %v269 = vunpack.c.l.b16 %v135
    %v270 = vunpack.c.h.b16 %v135
    %v271 = vunpack.c.l.b16 %v136
    %v272 = vunpack.c.h.b16 %v136
    %v273 = vunpack.c.l.b16 %v137
    %v274 = vunpack.c.h.b16 %v137
    %v275 = vunpack.c.l.b16 %v138
    %v276 = vunpack.c.h.b16 %v138
    %v277 = vunpack.c.l.b16 %v139
    %v278 = vunpack.c.h.b16 %v139
    %v279 = vunpack.c.l.b16 %v140
    %v280 = vunpack.c.h.b16 %v140
    %v281 = vunpack.c.l.b16 %v141
    %v282 = vunpack.c.h.b16 %v141
    %v283 = vunpack.c.l.b16 %v142
    %v284 = vunpack.c.h.b16 %v142
    %v285 = vunpack.c.l.b16 %v143
    %v286 = vunpack.c.h.b16 %v143
    %v287 = vunpack.c.l.b16 %v144
    %v288 = vunpack.c.h.b16 %v144
    %v289 = vunpack.c.l.b16 %v145
    %v290 = vunpack.c.h.b16 %v145
    %v291 = vunpack.c.l.b16 %v146
    %v292 = vunpack.c.h.b16 %v146
    %v293 = vunpack.c.l.b16 %v147
    %v294 = vunpack.c.h.b16 %v147
    %v295 = vunpack.c.l.b16 %v148
    %v296 = vunpack.c.h.b16 %v148
    %v297 = vunpack.c.l.b16 %v149
    %v298 = vunpack.c.h.b16 %v149
    %v299 = vunpack.c.l.b16 %v150
    %v300 = vunpack.c.h.b16 %v150
    %v301 = vunpack.c.l.b16 %v151
    %v302 = vunpack.c.h.b16 %v151
    %v303 = vunpack.c.l.b16 %v152
    %v304 = vunpack.c.h.b16 %v152
    %v305 = vunpack.c.l.b16 %v153
    %v306 = vunpack.c.h.b16 %v153
    %v307 = vunpack.c.l.b16 %v154
    %v308 = vunpack.c.h.b16 %v154
    %v309 = vunpack.c.l.b16 %v155
    %v310 = vunpack.c.h.b16 %v155
    %v311 = vunpack.c.l.b16 %v156
    %v312 = vunpack.c.h.b16 %v156
    %v313 = vunpack.c.l.b16 %v157
    %v314 = vunpack.c.h.b16 %v157
    %v315 = vunpack.c.l.b16 %v158
    %v316 = vunpack.c.h.b16 %v158
    %v317 = vunpack.c.l.b16 %v159
    %v318 = vunpack.c.h.b16 %v159
    %v319 = vunpack.c.l.b16 %v160
    %v320 = vunpack.c.h.b16 %v160
    %v321 = vunpack.c.l.b16 %v161
    %v322 = vunpack.c.h.b16 %v161
    %v323 = vunpack.c.l.b16 %v162
    %v324 = vunpack.c.h.b16 %v162
    %v325 = vunpack.c.l.b16 %v163
    %v326 = vunpack.c.h.b16 %v163
    %v327 = vunpack.c.l.b16 %v164
    %v328 = vunpack.c.h.b16 %v164
    %v329 = vunpack.c.l.b16 %v165
    %v330 = vunpack.c.h.b16 %v165
    %v331 = vunpack.c.l.b16 %v166
    %v332 = vunpack.c.h.b16 %v166
    %v333 = vunpack.c.l.b16 %v167
    %v334 = vunpack.c.h.b16 %v167
    %v335 = vunpack.c.l.b16 %v168
    %v336 = vunpack.c.h.b16 %v168
    %v337 = vunpack.c.l.b16 %v169
    %v338 = vunpack.c.h.b16 %v169
    %v339 = vunpack.c.l.b16 %v170
    %v340 = vunpack.c.h.b16 %v170
    %v341 = vunpack.c.l.b16 %v171
    %v342 = vunpack.c.h.b16 %v171
    %v343 = vunpack.c.l.b16 %v172
    %v344 = vunpack.c.h.b16 %v172
    %v345 = vunpack.c.l.b16 %v173
    %v346 = vunpack.c.h.b16 %v173
    %v347 = vunpack.c.l.b16 %v174
    %v348 = vunpack.c.h.b16 %v174
    %v349 = vunpack.c.l.b16 %v175
    %v350 = vunpack.c.h.b16 %v175
    %v351 = vunpack.c.l.b16 %v176
    %v352 = vunpack.c.h.b16 %v176
    %v353 = vunpack.c.l.b16 %v177
    %v354 = vunpack.c.h.b16 %v177
    %v355 = vunpack.c.l.b16 %v178
    %v356 = vunpack.c.h.b16 %v178
    %v357 = vunpack.c.l.b16 %v179
    %v358 = vunpack.c.h.b16 %v179
    %v359 = vunpack.c.l.b16 %v180
    %v360 = vunpack.c.h.b16 %v180
    %v361 = vunpack.c.l.b16 %v181
    %v362 = vunpack.c.h.b16 %v181
    %v363 = vunpack.c.l.b16 %v182
    %v364 = vunpack.c.h.b16 %v182
    %v365 = vunpack.c.l.b16 %v183
    %v366 = vunpack.c.h.b16 %v183
    %v367 = vunpack.c.l.b16 %v184
    %v368 = vunpack.c.h.b16 %v184
    %v369 = vunpack.c.l.b16 %v185
    %v370 = vunpack.c.h.b16 %v185
    %v371 = vunpack.c.l.b16 %v186
    %v372 = vunpack.c.h.b16 %v186
    %v373 = vunpack.c.l.b16 %v187
    %v374 = vunpack.c.h.b16 %v187
    %v375 = vunpack.c.l.b16 %v188
    %v376 = vunpack.c.h.b16 %v188
    %v377 = vunpack.c.l.b16 %v189
    %v378 = vunpack.c.h.b16 %v189
    %v379 = vunpack.c.l.b16 %v190
    %v380 = vunpack.c.h.b16 %v190
    %v381 = vunpack.c.l.b16 %v191
    %v382 = vunpack.c.h.b16 %v191
    %v383 = vunpack.c.l.b16 %v192
    %v384 = vunpack.c.h.b16 %v192
    %v385 = vpack.c.b16 %v265, %v257
    %v386 = vpack.c.b16 %v266, %v258
    %v387 = vpack.c.b16 %v267, %v259
    %v388 = vpack.c.b16 %v268, %v260
    %v389 = vpack.c.b16 %v269, %v261
    %v390 = vpack.c.b16 %v270, %v262
    %v391 = vpack.c.b16 %v271, %v263
    %v392 = vpack.c.b16 %v272, %v264
    %v393 = vpack.c.b16 %v281, %v273
    %v394 = vpack.c.b16 %v282, %v274
    %v395 = vpack.c.b16 %v283, %v275
    %v396 = vpack.c.b16 %v284, %v276
    %v397 = vpack.c.b16 %v285, %v277
    %v398 = vpack.c.b16 %v286, %v278
    %v399 = vpack.c.b16 %v287, %v279
    %v400 = vpack.c.b16 %v288, %v280
    %v401 = vpack.c.b16 %v297, %v289
    %v402 = vpack.c.b16 %v298, %v290
    %v403 = vpack.c.b16 %v299, %v291
    %v404 = vpack.c.b16 %v300, %v292
    %v405 = vpack.c.b16 %v301, %v293
    %v406 = vpack.c.b16 %v302, %v294
    %v407 = vpack.c.b16 %v303, %v295
    %v408 = vpack.c.b16 %v304, %v296
    %v409 = vpack.c.b16 %v313, %v305
    %v410 = vpack.c.b16 %v314, %v306
    %v411 = vpack.c.b16 %v315, %v307
    %v412 = vpack.c.b16 %v316, %v308
    %v413 = vpack.c.b16 %v317, %v309
    %v414 = vpack.c.b16 %v318, %v310
    %v415 = vpack.c.b16 %v319, %v311
    %v416 = vpack.c.b16 %v320, %v312
    %v417 = vpack.c.b16 %v329, %v321
    %v418 = vpack.c.b16 %v330, %v322
    %v419 = vpack.c.b16 %v331, %v323
    %v420 = vpack.c.b16 %v332, %v324
    %v421 = vpack.c.b16 %v333, %v325
    %v422 = vpack.c.b16 %v334, %v326
    %v423 = vpack.c.b16 %v335, %v327
    %v424 = vpack.c.b16 %v336, %v328
    %v425 = vpack.c.b16 %v345, %v337
    %v426 = vpack.c.b16 %v346, %v338
    %v427 = vpack.c.b16 %v347, %v339
    %v428 = vpack.c.b16 %v348, %v340
    %v429 = vpack.c.b16 %v349, %v341
    %v430 = vpack.c.b16 %v350, %v342
    %v431 = vpack.c.b16 %v351, %v343
    %v432 = vpack.c.b16 %v352, %v344
    %v433 = vpack.c.b16 %v361, %v353
    %v434 = vpack.c.b16 %v362, %v354
    %v435 = vpack.c.b16 %v363, %v355
    %v436 = vpack.c.b16 %v364, %v356
    %v437 = vpack.c.b16 %v365, %v357
    %v438 = vpack.c.b16 %v366, %v358
    %v439 = vpack.c.b16 %v367, %v359
    %v440 = vpack.c.b16 %v368, %v360
    %v441 = vpack.c.b16 %v377, %v369
    %v442 = vpack.c.b16 %v378, %v370
    %v443 = vpack.c.b16 %v379, %v371
    %v444 = vpack.c.b16 %v380, %v372
    %v445 = vpack.c.b16 %v381, %v373
    %v446 = vpack.c.b16 %v382, %v374
    %v447 = vpack.c.b16 %v383, %v375
    %v448 = vpack.c.b16 %v384, %v376
    %513 = vmatpush.bf16.msra.mxu0 %v441
    %514 = vmatpush.bf16.msra.mxu0 %v433
    %515 = vmatpush.bf16.msra.mxu0 %v425
    %516 = vmatpush.bf16.msra.mxu0 %v417
    %517 = vmatpush.bf16.msra.mxu0 %v409
    %518 = vmatpush.bf16.msra.mxu0 %v401
    %519 = vmatpush.bf16.msra.mxu0 %v393
    %520 = vmatpush.bf16.msra.mxu0 %v385
    %521 = vmatmul.bf16.gmra.mxu0 %v127
    %v522 = vpop.f32.mrf.mxu0
    %v523 = vadd.f32 0.0, %v522
    %v524 = vpop.f32.mrf.mxu0
    %v525 = vadd.f32 0.0, %v524
    %526 = vmatmul.bf16.gmra.mxu0 %v128
    %v527 = vpop.f32.mrf.mxu0
    %v528 = vadd.f32 0.0, %v527
    %v529 = vpop.f32.mrf.mxu0
    %v530 = vadd.f32 0.0, %v529
    %531 = vdwg.mxu0
    %532 = vmatpush.bf16.msra.mxu0 %v442
    %533 = vmatpush.bf16.msra.mxu0 %v434
    %534 = vmatpush.bf16.msra.mxu0 %v426
    %535 = vmatpush.bf16.msra.mxu0 %v418
    %536 = vmatpush.bf16.msra.mxu0 %v410
    %537 = vmatpush.bf16.msra.mxu0 %v402
    %538 = vmatpush.bf16.msra.mxu0 %v394
    %539 = vmatpush.bf16.msra.mxu0 %v386
    %540 = vmatmul.bf16.gmra.mxu0 %v127
    %v541 = vpop.f32.mrf.mxu0
    %v542 = vadd.f32 0.0, %v541
    %v543 = vpop.f32.mrf.mxu0
    %v544 = vadd.f32 0.0, %v543
    %545 = vmatmul.bf16.gmra.mxu0 %v128
    %v546 = vpop.f32.mrf.mxu0
    %v547 = vadd.f32 0.0, %v546
    %v548 = vpop.f32.mrf.mxu0
    %v549 = vadd.f32 0.0, %v548
    %550 = vdwg.mxu0
    %551 = vmatpush.bf16.msra.mxu0 %v443
    %552 = vmatpush.bf16.msra.mxu0 %v435
    %553 = vmatpush.bf16.msra.mxu0 %v427
    %554 = vmatpush.bf16.msra.mxu0 %v419
    %555 = vmatpush.bf16.msra.mxu0 %v411
    %556 = vmatpush.bf16.msra.mxu0 %v403
    %557 = vmatpush.bf16.msra.mxu0 %v395
    %558 = vmatpush.bf16.msra.mxu0 %v387
    %559 = vmatmul.bf16.gmra.mxu0 %v127
    %v560 = vpop.f32.mrf.mxu0
    %v561 = vadd.f32 0.0, %v560
    %v562 = vpop.f32.mrf.mxu0
    %v563 = vadd.f32 0.0, %v562
    %564 = vmatmul.bf16.gmra.mxu0 %v128
    %v565 = vpop.f32.mrf.mxu0
    %v566 = vadd.f32 0.0, %v565
    %v567 = vpop.f32.mrf.mxu0
    %v568 = vadd.f32 0.0, %v567
    %569 = vdwg.mxu0
    %570 = vmatpush.bf16.msra.mxu0 %v444
    %571 = vmatpush.bf16.msra.mxu0 %v436
    %572 = vmatpush.bf16.msra.mxu0 %v428
    %573 = vmatpush.bf16.msra.mxu0 %v420
    %574 = vmatpush.bf16.msra.mxu0 %v412
    %575 = vmatpush.bf16.msra.mxu0 %v404
    %576 = vmatpush.bf16.msra.mxu0 %v396
    %577 = vmatpush.bf16.msra.mxu0 %v388
    %578 = vmatmul.bf16.gmra.mxu0 %v127
    %v579 = vpop.f32.mrf.mxu0
    %v580 = vadd.f32 0.0, %v579
    %v581 = vpop.f32.mrf.mxu0
    %v582 = vadd.f32 0.0, %v581
    %583 = vmatmul.bf16.gmra.mxu0 %v128
    %v584 = vpop.f32.mrf.mxu0
    %v585 = vadd.f32 0.0, %v584
    %v586 = vpop.f32.mrf.mxu0
    %v587 = vadd.f32 0.0, %v586
    %588 = vdwg.mxu0
    %589 = vmatpush.bf16.msra.mxu0 %v445
    %590 = vmatpush.bf16.msra.mxu0 %v437
    %591 = vmatpush.bf16.msra.mxu0 %v429
    %592 = vmatpush.bf16.msra.mxu0 %v421
    %593 = vmatpush.bf16.msra.mxu0 %v413
    %594 = vmatpush.bf16.msra.mxu0 %v405
    %595 = vmatpush.bf16.msra.mxu0 %v397
    %596 = vmatpush.bf16.msra.mxu0 %v389
    %597 = vmatmul.bf16.gmra.mxu0 %v127
    %v598 = vpop.f32.mrf.mxu0
    %v599 = vadd.f32 0.0, %v598
    %v600 = vpop.f32.mrf.mxu0
    %v601 = vadd.f32 0.0, %v600
    %602 = vmatmul.bf16.gmra.mxu0 %v128
    %v603 = vpop.f32.mrf.mxu0
    %v604 = vadd.f32 0.0, %v603
    %v605 = vpop.f32.mrf.mxu0
    %v606 = vadd.f32 0.0, %v605
    %607 = vdwg.mxu0
    %608 = vmatpush.bf16.msra.mxu0 %v446
    %609 = vmatpush.bf16.msra.mxu0 %v438
    %610 = vmatpush.bf16.msra.mxu0 %v430
    %611 = vmatpush.bf16.msra.mxu0 %v422
    %612 = vmatpush.bf16.msra.mxu0 %v414
    %613 = vmatpush.bf16.msra.mxu0 %v406
    %614 = vmatpush.bf16.msra.mxu0 %v398
    %615 = vmatpush.bf16.msra.mxu0 %v390
    %616 = vmatmul.bf16.gmra.mxu0 %v127
    %v617 = vpop.f32.mrf.mxu0
    %v618 = vadd.f32 0.0, %v617
    %v619 = vpop.f32.mrf.mxu0
    %v620 = vadd.f32 0.0, %v619
    %621 = vmatmul.bf16.gmra.mxu0 %v128
    %v622 = vpop.f32.mrf.mxu0
    %v623 = vadd.f32 0.0, %v622
    %v624 = vpop.f32.mrf.mxu0
    %v625 = vadd.f32 0.0, %v624
    %626 = vdwg.mxu0
    %627 = vmatpush.bf16.msra.mxu0 %v447
    %628 = vmatpush.bf16.msra.mxu0 %v439
    %629 = vmatpush.bf16.msra.mxu0 %v431
    %630 = vmatpush.bf16.msra.mxu0 %v423
    %631 = vmatpush.bf16.msra.mxu0 %v415
    %632 = vmatpush.bf16.msra.mxu0 %v407
    %633 = vmatpush.bf16.msra.mxu0 %v399
    %634 = vmatpush.bf16.msra.mxu0 %v391
    %635 = vmatmul.bf16.gmra.mxu0 %v127
    %v636 = vpop.f32.mrf.mxu0
    %v637 = vadd.f32 0.0, %v636
    %v638 = vpop.f32.mrf.mxu0
    %v639 = vadd.f32 0.0, %v638
    %640 = vmatmul.bf16.gmra.mxu0 %v128
    %v641 = vpop.f32.mrf.mxu0
    %v642 = vadd.f32 0.0, %v641
    %v643 = vpop.f32.mrf.mxu0
    %v644 = vadd.f32 0.0, %v643
    %645 = vdwg.mxu0
    %646 = vmatpush.bf16.msra.mxu0 %v448
    %647 = vmatpush.bf16.msra.mxu0 %v440
    %648 = vmatpush.bf16.msra.mxu0 %v432
    %649 = vmatpush.bf16.msra.mxu0 %v424
    %650 = vmatpush.bf16.msra.mxu0 %v416
    %651 = vmatpush.bf16.msra.mxu0 %v408
    %652 = vmatpush.bf16.msra.mxu0 %v400
    %653 = vmatpush.bf16.msra.mxu0 %v392
    %654 = vmatmul.bf16.gmra.mxu0 %v127
    %v655 = vpop.f32.mrf.mxu0
    %v656 = vadd.f32 0.0, %v655
    %v657 = vpop.f32.mrf.mxu0
    %v658 = vadd.f32 0.0, %v657
    %659 = vmatmul.bf16.gmra.mxu0 %v128
    %v660 = vpop.f32.mrf.mxu0
    %v661 = vadd.f32 0.0, %v660
    %v662 = vpop.f32.mrf.mxu0
    %v663 = vadd.f32 0.0, %v662
    %664 = vdwg.mxu0
    %v665 = vld [vmem:[#allocation7] sm:$0xff]
    %v666 = vld [vmem:[#allocation8] sm:$0xff]
    %v667 = vadd.f32 %v523, %v525
    %v668 = vadd.f32 %v667, %v528
    %v669 = vadd.f32 %v668, %v530
    %v670 = vrot.slane %v669, 4
    %v671 = vadd.f32 %v669, %v670
    %v672 = vrot.slane %v671, 2
    %v673 = vadd.f32 %v671, %v672
    %v674 = vrot.slane %v673, 1
    %v675 = vadd.f32 %v673, %v674
    %v676 = vadd.f32 %v542, %v544
    %v677 = vadd.f32 %v676, %v547
    %v678 = vadd.f32 %v677, %v549
    %v679 = vrot.slane %v678, 4
    %v680 = vadd.f32 %v678, %v679
    %v681 = vrot.slane %v680, 2
    %v682 = vadd.f32 %v680, %v681
    %v683 = vrot.slane %v682, 1
    %v684 = vadd.f32 %v682, %v683
    %v685 = vmul.f32 %v523, %v523
    %v686 = vmul.f32 %v542, %v542
    %v687 = vmul.f32 %v525, %v525
    %v688 = vmul.f32 %v544, %v544
    %v689 = vmul.f32 %v528, %v528
    %v690 = vmul.f32 %v547, %v547
    %v691 = vmul.f32 %v530, %v530
    %v692 = vmul.f32 %v549, %v549
    %v693 = vadd.f32 %v685, %v687
    %v694 = vadd.f32 %v693, %v689
    %v695 = vadd.f32 %v694, %v691
    %v696 = vrot.slane %v695, 4
    %v697 = vadd.f32 %v695, %v696
    %v698 = vrot.slane %v697, 2
    %v699 = vadd.f32 %v697, %v698
    %v700 = vrot.slane %v699, 1
    %v701 = vadd.f32 %v699, %v700
    %v702 = vadd.f32 %v686, %v688
    %v703 = vadd.f32 %v702, %v690
    %v704 = vadd.f32 %v703, %v692
    %v705 = vrot.slane %v704, 4
    %v706 = vadd.f32 %v704, %v705
    %v707 = vrot.slane %v706, 2
    %v708 = vadd.f32 %v706, %v707
    %v709 = vrot.slane %v708, 1
    %v710 = vadd.f32 %v708, %v709
    %v711 = vmul.f32 %v675, 0.03125
    %v712 = vmul.f32 %v684, 0.03125
    %v713 = vmul.f32 %v701, 0.03125
    %v714 = vmul.f32 %v710, 0.03125
    %v715 = vmul.f32 %v711, %v711
    %v716 = vmul.f32 %v712, %v712
    %v717 = vsub.f32 %v713, %v715
    %v718 = vsub.f32 %v714, %v716
    %v719 = vmax.f32 %v717, 0.0
    %v720 = vmax.f32 %v718, 0.0
    %v721 = vadd.f32 %v719, 1e-05
    %v722 = vadd.f32 %v720, 1e-05
    %v723 = vrsqrt.pop %v721
    %v724 = vmul.f32 %v723, %v721
    %v725 = vmul.f32 %v724, %v723
    %v726 = vmul.f32 0.5, %v725
    %v727 = vsub.f32 1.5, %v726
    %v728 = vmul.f32 %v723, %v727
    %vm729 = vweird.f32 %v721
    %vm730 = vweird.f32 %v723
    %vm731 = vmor %vm729, %vm730
    %v732 = vsel %vm731, %v723, %v728
    %v733 = vrsqrt.pop %v722
    %v734 = vmul.f32 %v733, %v722
    %v735 = vmul.f32 %v734, %v733
    %v736 = vmul.f32 0.5, %v735
    %v737 = vsub.f32 1.5, %v736
    %v738 = vmul.f32 %v733, %v737
    %vm739 = vweird.f32 %v722
    %vm740 = vweird.f32 %v733
    %vm741 = vmor %vm739, %vm740
    %v742 = vsel %vm741, %v733, %v738
    %v745 = vrot.slane %v742, 7
    %vm746 = vcmask 1040384
    %v747 = vsel %vm746, %v732, %v745
    %v749 = vmul.f32 %v665, %v747
    %v751 = vperm.slane %v749, 0
    %v752 = vperm.slane %v749, 1
    %v755 = vmul.f32 %v711, %v751
    %v756 = vmul.f32 %v712, %v752
    %v759 = vrot.slane %v756, 7
    %v760 = vsel %vm746, %v755, %v759
    %v762 = vsub.f32 %v666, %v760
    %v763 = vmul.f32 %v523, %v751
    %v764 = vmul.f32 %v542, %v752
    %v765 = vmul.f32 %v525, %v751
    %v766 = vmul.f32 %v544, %v752
    %v767 = vmul.f32 %v528, %v751
    %v768 = vmul.f32 %v547, %v752
    %v769 = vmul.f32 %v530, %v751
    %v770 = vmul.f32 %v549, %v752
    %v772 = vperm.slane %v762, 0
    %v773 = vperm.slane %v762, 1
    %v776 = vadd.f32 %v763, %v772
    %v777 = vadd.f32 %v764, %v773
    %v778 = vadd.f32 %v765, %v772
    %v779 = vadd.f32 %v766, %v773
    %v780 = vadd.f32 %v767, %v772
    %v781 = vadd.f32 %v768, %v773
    %v782 = vadd.f32 %v769, %v772
    %v783 = vadd.f32 %v770, %v773
    %v784 = vmax.f32 %v776, 0.0
    %v785 = vmax.f32 %v777, 0.0
    %v786 = vmax.f32 %v778, 0.0
    %v787 = vmax.f32 %v779, 0.0
    %v788 = vmax.f32 %v780, 0.0
    %v789 = vmax.f32 %v781, 0.0
    %v790 = vmax.f32 %v782, 0.0
    %v791 = vmax.f32 %v783, 0.0
    %v792 = vpack.c.bf16 %v785, %v784
    %v793 = vpack.c.bf16 %v787, %v786
    %v794 = vpack.c.bf16 %v789, %v788
    %v795 = vpack.c.bf16 %v791, %v790
    %v796 = vadd.f32 %v561, %v563
    %v797 = vadd.f32 %v796, %v566
    %v798 = vadd.f32 %v797, %v568
    %v799 = vrot.slane %v798, 4
    %v800 = vadd.f32 %v798, %v799
    %v801 = vrot.slane %v800, 2
    %v802 = vadd.f32 %v800, %v801
    %v803 = vrot.slane %v802, 1
    %v804 = vadd.f32 %v802, %v803
    %v805 = vadd.f32 %v580, %v582
    %v806 = vadd.f32 %v805, %v585
    %v807 = vadd.f32 %v806, %v587
    %v808 = vrot.slane %v807, 4
    %v809 = vadd.f32 %v807, %v808
    %v810 = vrot.slane %v809, 2
    %v811 = vadd.f32 %v809, %v810
    %v812 = vrot.slane %v811, 1
    %v813 = vadd.f32 %v811, %v812
    %v814 = vmul.f32 %v561, %v561
    %v815 = vmul.f32 %v580, %v580
    %v816 = vmul.f32 %v563, %v563
    %v817 = vmul.f32 %v582, %v582
    %v818 = vmul.f32 %v566, %v566
    %v819 = vmul.f32 %v585, %v585
    %v820 = vmul.f32 %v568, %v568
    %v821 = vmul.f32 %v587, %v587
    %v822 = vadd.f32 %v814, %v816
    %v823 = vadd.f32 %v822, %v818
    %v824 = vadd.f32 %v823, %v820
    %v825 = vrot.slane %v824, 4
    %v826 = vadd.f32 %v824, %v825
    %v827 = vrot.slane %v826, 2
    %v828 = vadd.f32 %v826, %v827
    %v829 = vrot.slane %v828, 1
    %v830 = vadd.f32 %v828, %v829
    %v831 = vadd.f32 %v815, %v817
    %v832 = vadd.f32 %v831, %v819
    %v833 = vadd.f32 %v832, %v821
    %v834 = vrot.slane %v833, 4
    %v835 = vadd.f32 %v833, %v834
    %v836 = vrot.slane %v835, 2
    %v837 = vadd.f32 %v835, %v836
    %v838 = vrot.slane %v837, 1
    %v839 = vadd.f32 %v837, %v838
    %v840 = vmul.f32 %v804, 0.03125
    %v841 = vmul.f32 %v813, 0.03125
    %v842 = vmul.f32 %v830, 0.03125
    %v843 = vmul.f32 %v839, 0.03125
    %v844 = vmul.f32 %v840, %v840
    %v845 = vmul.f32 %v841, %v841
    %v846 = vsub.f32 %v842, %v844
    %v847 = vsub.f32 %v843, %v845
    %v848 = vmax.f32 %v846, 0.0
    %v849 = vmax.f32 %v847, 0.0
    %v850 = vadd.f32 %v848, 1e-05
    %v851 = vadd.f32 %v849, 1e-05
    %v852 = vrsqrt.pop %v850
    %v853 = vmul.f32 %v852, %v850
    %v854 = vmul.f32 %v853, %v852
    %v855 = vmul.f32 0.5, %v854
    %v856 = vsub.f32 1.5, %v855
    %v857 = vmul.f32 %v852, %v856
    %vm858 = vweird.f32 %v850
    %vm859 = vweird.f32 %v852
    %vm860 = vmor %vm858, %vm859
    %v861 = vsel %vm860, %v852, %v857
    %v862 = vrsqrt.pop %v851
    %v863 = vmul.f32 %v862, %v851
    %v864 = vmul.f32 %v863, %v862
    %v865 = vmul.f32 0.5, %v864
    %v866 = vsub.f32 1.5, %v865
    %v867 = vmul.f32 %v862, %v866
    %vm868 = vweird.f32 %v851
    %vm869 = vweird.f32 %v862
    %vm870 = vmor %vm868, %vm869
    %v871 = vsel %vm870, %v862, %v867
    %v873 = vrot.slane %v665, 2
    %v877 = vrot.slane %v871, 7
    %v878 = vsel %vm746, %v861, %v877
    %v880 = vmul.f32 %v873, %v878
    %v882 = vperm.slane %v880, 0
    %v883 = vperm.slane %v880, 1
    %v886 = vmul.f32 %v840, %v882
    %v887 = vmul.f32 %v841, %v883
    %v889 = vrot.slane %v666, 2
    %v893 = vrot.slane %v887, 7
    %v894 = vsel %vm746, %v886, %v893
    %v896 = vsub.f32 %v889, %v894
    %v897 = vmul.f32 %v561, %v882
    %v898 = vmul.f32 %v580, %v883
    %v899 = vmul.f32 %v563, %v882
    %v900 = vmul.f32 %v582, %v883
    %v901 = vmul.f32 %v566, %v882
    %v902 = vmul.f32 %v585, %v883
    %v903 = vmul.f32 %v568, %v882
    %v904 = vmul.f32 %v587, %v883
    %v906 = vperm.slane %v896, 0
    %v907 = vperm.slane %v896, 1
    %v910 = vadd.f32 %v897, %v906
    %v911 = vadd.f32 %v898, %v907
    %v912 = vadd.f32 %v899, %v906
    %v913 = vadd.f32 %v900, %v907
    %v914 = vadd.f32 %v901, %v906
    %v915 = vadd.f32 %v902, %v907
    %v916 = vadd.f32 %v903, %v906
    %v917 = vadd.f32 %v904, %v907
    %v918 = vmax.f32 %v910, 0.0
    %v919 = vmax.f32 %v911, 0.0
    %v920 = vmax.f32 %v912, 0.0
    %v921 = vmax.f32 %v913, 0.0
    %v922 = vmax.f32 %v914, 0.0
    %v923 = vmax.f32 %v915, 0.0
    %v924 = vmax.f32 %v916, 0.0
    %v925 = vmax.f32 %v917, 0.0
    %v926 = vpack.c.bf16 %v919, %v918
    %v927 = vpack.c.bf16 %v921, %v920
    %v928 = vpack.c.bf16 %v923, %v922
    %v929 = vpack.c.bf16 %v925, %v924
    %v930 = vadd.f32 %v599, %v601
    %v931 = vadd.f32 %v930, %v604
    %v932 = vadd.f32 %v931, %v606
    %v933 = vrot.slane %v932, 4
    %v934 = vadd.f32 %v932, %v933
    %v935 = vrot.slane %v934, 2
    %v936 = vadd.f32 %v934, %v935
    %v937 = vrot.slane %v936, 1
    %v938 = vadd.f32 %v936, %v937
    %v939 = vadd.f32 %v618, %v620
    %v940 = vadd.f32 %v939, %v623
    %v941 = vadd.f32 %v940, %v625
    %v942 = vrot.slane %v941, 4
    %v943 = vadd.f32 %v941, %v942
    %v944 = vrot.slane %v943, 2
    %v945 = vadd.f32 %v943, %v944
    %v946 = vrot.slane %v945, 1
    %v947 = vadd.f32 %v945, %v946
    %v948 = vmul.f32 %v599, %v599
    %v949 = vmul.f32 %v618, %v618
    %v950 = vmul.f32 %v601, %v601
    %v951 = vmul.f32 %v620, %v620
    %v952 = vmul.f32 %v604, %v604
    %v953 = vmul.f32 %v623, %v623
    %v954 = vmul.f32 %v606, %v606
    %v955 = vmul.f32 %v625, %v625
    %v956 = vadd.f32 %v948, %v950
    %v957 = vadd.f32 %v956, %v952
    %v958 = vadd.f32 %v957, %v954
    %v959 = vrot.slane %v958, 4
    %v960 = vadd.f32 %v958, %v959
    %v961 = vrot.slane %v960, 2
    %v962 = vadd.f32 %v960, %v961
    %v963 = vrot.slane %v962, 1
    %v964 = vadd.f32 %v962, %v963
    %v965 = vadd.f32 %v949, %v951
    %v966 = vadd.f32 %v965, %v953
    %v967 = vadd.f32 %v966, %v955
    %v968 = vrot.slane %v967, 4
    %v969 = vadd.f32 %v967, %v968
    %v970 = vrot.slane %v969, 2
    %v971 = vadd.f32 %v969, %v970
    %v972 = vrot.slane %v971, 1
    %v973 = vadd.f32 %v971, %v972
    %v974 = vmul.f32 %v938, 0.03125
    %v975 = vmul.f32 %v947, 0.03125
    %v976 = vmul.f32 %v964, 0.03125
    %v977 = vmul.f32 %v973, 0.03125
    %v978 = vmul.f32 %v974, %v974
    %v979 = vmul.f32 %v975, %v975
    %v980 = vsub.f32 %v976, %v978
    %v981 = vsub.f32 %v977, %v979
    %v982 = vmax.f32 %v980, 0.0
    %v983 = vmax.f32 %v981, 0.0
    %v984 = vadd.f32 %v982, 1e-05
    %v985 = vadd.f32 %v983, 1e-05
    %v986 = vrsqrt.pop %v984
    %v987 = vmul.f32 %v986, %v984
    %v988 = vmul.f32 %v987, %v986
    %v989 = vmul.f32 0.5, %v988
    %v990 = vsub.f32 1.5, %v989
    %v991 = vmul.f32 %v986, %v990
    %vm992 = vweird.f32 %v984
    %vm993 = vweird.f32 %v986
    %vm994 = vmor %vm992, %vm993
    %v995 = vsel %vm994, %v986, %v991
    %v996 = vrsqrt.pop %v985
    %v997 = vmul.f32 %v996, %v985
    %v998 = vmul.f32 %v997, %v996
    %v999 = vmul.f32 0.5, %v998
    %v1000 = vsub.f32 1.5, %v999
    %v1001 = vmul.f32 %v996, %v1000
    %vm1002 = vweird.f32 %v985
    %vm1003 = vweird.f32 %v996
    %vm1004 = vmor %vm1002, %vm1003
    %v1005 = vsel %vm1004, %v996, %v1001
    %v1006 = vrot.slane %v665, 4
    %v1010 = vrot.slane %v1005, 7
    %v1011 = vsel %vm746, %v995, %v1010
    %v1013 = vmul.f32 %v1006, %v1011
    %v1015 = vperm.slane %v1013, 0
    %v1016 = vperm.slane %v1013, 1
    %v1019 = vmul.f32 %v974, %v1015
    %v1020 = vmul.f32 %v975, %v1016
    %v1021 = vrot.slane %v666, 4
    %v1025 = vrot.slane %v1020, 7
    %v1026 = vsel %vm746, %v1019, %v1025
    %v1028 = vsub.f32 %v1021, %v1026
    %v1029 = vmul.f32 %v599, %v1015
    %v1030 = vmul.f32 %v618, %v1016
    %v1031 = vmul.f32 %v601, %v1015
    %v1032 = vmul.f32 %v620, %v1016
    %v1033 = vmul.f32 %v604, %v1015
    %v1034 = vmul.f32 %v623, %v1016
    %v1035 = vmul.f32 %v606, %v1015
    %v1036 = vmul.f32 %v625, %v1016
    %v1038 = vperm.slane %v1028, 0
    %v1039 = vperm.slane %v1028, 1
    %v1042 = vadd.f32 %v1029, %v1038
    %v1043 = vadd.f32 %v1030, %v1039
    %v1044 = vadd.f32 %v1031, %v1038
    %v1045 = vadd.f32 %v1032, %v1039
    %v1046 = vadd.f32 %v1033, %v1038
    %v1047 = vadd.f32 %v1034, %v1039
    %v1048 = vadd.f32 %v1035, %v1038
    %v1049 = vadd.f32 %v1036, %v1039
    %v1050 = vmax.f32 %v1042, 0.0
    %v1051 = vmax.f32 %v1043, 0.0
    %v1052 = vmax.f32 %v1044, 0.0
    %v1053 = vmax.f32 %v1045, 0.0
    %v1054 = vmax.f32 %v1046, 0.0
    %v1055 = vmax.f32 %v1047, 0.0
    %v1056 = vmax.f32 %v1048, 0.0
    %v1057 = vmax.f32 %v1049, 0.0
    %v1058 = vpack.c.bf16 %v1051, %v1050
    %v1059 = vpack.c.bf16 %v1053, %v1052
    %v1060 = vpack.c.bf16 %v1055, %v1054
    %v1061 = vpack.c.bf16 %v1057, %v1056
    %v1062 = vadd.f32 %v637, %v639
    %v1063 = vadd.f32 %v1062, %v642
    %v1064 = vadd.f32 %v1063, %v644
    %v1065 = vrot.slane %v1064, 4
    %v1066 = vadd.f32 %v1064, %v1065
    %v1067 = vrot.slane %v1066, 2
    %v1068 = vadd.f32 %v1066, %v1067
    %v1069 = vrot.slane %v1068, 1
    %v1070 = vadd.f32 %v1068, %v1069
    %v1071 = vadd.f32 %v656, %v658
    %v1072 = vadd.f32 %v1071, %v661
    %v1073 = vadd.f32 %v1072, %v663
    %v1074 = vrot.slane %v1073, 4
    %v1075 = vadd.f32 %v1073, %v1074
    %v1076 = vrot.slane %v1075, 2
    %v1077 = vadd.f32 %v1075, %v1076
    %v1078 = vrot.slane %v1077, 1
    %v1079 = vadd.f32 %v1077, %v1078
    %v1080 = vmul.f32 %v637, %v637
    %v1081 = vmul.f32 %v656, %v656
    %v1082 = vmul.f32 %v639, %v639
    %v1083 = vmul.f32 %v658, %v658
    %v1084 = vmul.f32 %v642, %v642
    %v1085 = vmul.f32 %v661, %v661
    %v1086 = vmul.f32 %v644, %v644
    %v1087 = vmul.f32 %v663, %v663
    %v1088 = vadd.f32 %v1080, %v1082
    %v1089 = vadd.f32 %v1088, %v1084
    %v1090 = vadd.f32 %v1089, %v1086
    %v1091 = vrot.slane %v1090, 4
    %v1092 = vadd.f32 %v1090, %v1091
    %v1093 = vrot.slane %v1092, 2
    %v1094 = vadd.f32 %v1092, %v1093
    %v1095 = vrot.slane %v1094, 1
    %v1096 = vadd.f32 %v1094, %v1095
    %v1097 = vadd.f32 %v1081, %v1083
    %v1098 = vadd.f32 %v1097, %v1085
    %v1099 = vadd.f32 %v1098, %v1087
    %v1100 = vrot.slane %v1099, 4
    %v1101 = vadd.f32 %v1099, %v1100
    %v1102 = vrot.slane %v1101, 2
    %v1103 = vadd.f32 %v1101, %v1102
    %v1104 = vrot.slane %v1103, 1
    %v1105 = vadd.f32 %v1103, %v1104
    %v1106 = vmul.f32 %v1070, 0.03125
    %v1107 = vmul.f32 %v1079, 0.03125
    %v1108 = vmul.f32 %v1096, 0.03125
    %v1109 = vmul.f32 %v1105, 0.03125
    %v1110 = vmul.f32 %v1106, %v1106
    %v1111 = vmul.f32 %v1107, %v1107
    %v1112 = vsub.f32 %v1108, %v1110
    %v1113 = vsub.f32 %v1109, %v1111
    %v1114 = vmax.f32 %v1112, 0.0
    %v1115 = vmax.f32 %v1113, 0.0
    %v1116 = vadd.f32 %v1114, 1e-05
    %v1117 = vadd.f32 %v1115, 1e-05
    %v1118 = vrsqrt.pop %v1116
    %v1119 = vmul.f32 %v1118, %v1116
    %v1120 = vmul.f32 %v1119, %v1118
    %v1121 = vmul.f32 0.5, %v1120
    %v1122 = vsub.f32 1.5, %v1121
    %v1123 = vmul.f32 %v1118, %v1122
    %vm1124 = vweird.f32 %v1116
    %vm1125 = vweird.f32 %v1118
    %vm1126 = vmor %vm1124, %vm1125
    %v1127 = vsel %vm1126, %v1118, %v1123
    %v1128 = vrsqrt.pop %v1117
    %v1129 = vmul.f32 %v1128, %v1117
    %v1130 = vmul.f32 %v1129, %v1128
    %v1131 = vmul.f32 0.5, %v1130
    %v1132 = vsub.f32 1.5, %v1131
    %v1133 = vmul.f32 %v1128, %v1132
    %vm1134 = vweird.f32 %v1117
    %vm1135 = vweird.f32 %v1128
    %vm1136 = vmor %vm1134, %vm1135
    %v1137 = vsel %vm1136, %v1128, %v1133
    %v1138 = vrot.slane %v665, 6
    %v1142 = vrot.slane %v1137, 7
    %v1143 = vsel %vm746, %v1127, %v1142
    %v1145 = vmul.f32 %v1138, %v1143
    %v1147 = vperm.slane %v1145, 0
    %v1148 = vperm.slane %v1145, 1
    %v1151 = vmul.f32 %v1106, %v1147
    %v1152 = vmul.f32 %v1107, %v1148
    %v1153 = vrot.slane %v666, 6
    %v1157 = vrot.slane %v1152, 7
    %v1158 = vsel %vm746, %v1151, %v1157
    %v1160 = vsub.f32 %v1153, %v1158
    %v1161 = vmul.f32 %v637, %v1147
    %v1162 = vmul.f32 %v656, %v1148
    %v1163 = vmul.f32 %v639, %v1147
    %v1164 = vmul.f32 %v658, %v1148
    %v1165 = vmul.f32 %v642, %v1147
    %v1166 = vmul.f32 %v661, %v1148
    %v1167 = vmul.f32 %v644, %v1147
    %v1168 = vmul.f32 %v663, %v1148
    %v1170 = vperm.slane %v1160, 0
    %v1171 = vperm.slane %v1160, 1
    %v1174 = vadd.f32 %v1161, %v1170
    %v1175 = vadd.f32 %v1162, %v1171
    %v1176 = vadd.f32 %v1163, %v1170
    %v1177 = vadd.f32 %v1164, %v1171
    %v1178 = vadd.f32 %v1165, %v1170
    %v1179 = vadd.f32 %v1166, %v1171
    %v1180 = vadd.f32 %v1167, %v1170
    %v1181 = vadd.f32 %v1168, %v1171
    %v1182 = vmax.f32 %v1174, 0.0
    %v1183 = vmax.f32 %v1175, 0.0
    %v1184 = vmax.f32 %v1176, 0.0
    %v1185 = vmax.f32 %v1177, 0.0
    %v1186 = vmax.f32 %v1178, 0.0
    %v1187 = vmax.f32 %v1179, 0.0
    %v1188 = vmax.f32 %v1180, 0.0
    %v1189 = vmax.f32 %v1181, 0.0
    %v1190 = vpack.c.bf16 %v1183, %v1182
    %v1191 = vpack.c.bf16 %v1185, %v1184
    %v1192 = vpack.c.bf16 %v1187, %v1186
    %v1193 = vpack.c.bf16 %v1189, %v1188
    %v1198 = vunpack.c.l.b16 %v792
    %v1199 = vunpack.c.h.b16 %v792
    %v1200 = vunpack.c.l.b16 %v793
    %v1201 = vunpack.c.h.b16 %v793
    %v1202 = vunpack.c.l.b16 %v794
    %v1203 = vunpack.c.h.b16 %v794
    %v1204 = vunpack.c.l.b16 %v795
    %v1205 = vunpack.c.h.b16 %v795
    %v1206 = vpack.c.b16 %v1200, %v1198
    %v1207 = vpack.c.b16 %v1201, %v1199
    %v1208 = vpack.c.b16 %v1204, %v1202
    %v1209 = vpack.c.b16 %v1205, %v1203
    %v1218 = vunpack.c.l.b16 %v926
    %v1219 = vunpack.c.h.b16 %v926
    %v1220 = vunpack.c.l.b16 %v927
    %v1221 = vunpack.c.h.b16 %v927
    %v1222 = vunpack.c.l.b16 %v928
    %v1223 = vunpack.c.h.b16 %v928
    %v1224 = vunpack.c.l.b16 %v929
    %v1225 = vunpack.c.h.b16 %v929
    %v1226 = vpack.c.b16 %v1220, %v1218
    %v1227 = vpack.c.b16 %v1221, %v1219
    %v1228 = vpack.c.b16 %v1224, %v1222
    %v1229 = vpack.c.b16 %v1225, %v1223
    %v1238 = vunpack.c.l.b16 %v1058
    %v1239 = vunpack.c.h.b16 %v1058
    %v1240 = vunpack.c.l.b16 %v1059
    %v1241 = vunpack.c.h.b16 %v1059
    %v1242 = vunpack.c.l.b16 %v1060
    %v1243 = vunpack.c.h.b16 %v1060
    %v1244 = vunpack.c.l.b16 %v1061
    %v1245 = vunpack.c.h.b16 %v1061
    %v1246 = vpack.c.b16 %v1240, %v1238
    %v1247 = vpack.c.b16 %v1241, %v1239
    %v1248 = vpack.c.b16 %v1244, %v1242
    %v1249 = vpack.c.b16 %v1245, %v1243
    %v1258 = vunpack.c.l.b16 %v1190
    %v1259 = vunpack.c.h.b16 %v1190
    %v1260 = vunpack.c.l.b16 %v1191
    %v1261 = vunpack.c.h.b16 %v1191
    %v1262 = vunpack.c.l.b16 %v1192
    %v1263 = vunpack.c.h.b16 %v1192
    %v1264 = vunpack.c.l.b16 %v1193
    %v1265 = vunpack.c.h.b16 %v1193
    %v1266 = vpack.c.b16 %v1260, %v1258
    %v1267 = vpack.c.b16 %v1261, %v1259
    %v1268 = vpack.c.b16 %v1264, %v1262
    %v1269 = vpack.c.b16 %v1265, %v1263
    %v1274 = vld [vmem:[#allocation10] sm:$0xff]
    %v1275 = vld [vmem:[#allocation10 + $0x8] sm:$0xff]
    %v1276 = vld [vmem:[#allocation10 + $0x10] sm:$0xff]
    %v1277 = vld [vmem:[#allocation10 + $0x18] sm:$0xff]
    %v1278 = vld [vmem:[#allocation10 + $0x20] sm:$0xff]
    %v1279 = vld [vmem:[#allocation10 + $0x28] sm:$0xff]
    %v1280 = vld [vmem:[#allocation10 + $0x30] sm:$0xff]
    %v1281 = vld [vmem:[#allocation10 + $0x38] sm:$0xff]
    %v1282 = vld [vmem:[#allocation10 + $0x40] sm:$0xff]
    %v1283 = vld [vmem:[#allocation10 + $0x48] sm:$0xff]
    %v1284 = vld [vmem:[#allocation10 + $0x50] sm:$0xff]
    %v1285 = vld [vmem:[#allocation10 + $0x58] sm:$0xff]
    %v1286 = vld [vmem:[#allocation10 + $0x60] sm:$0xff]
    %v1287 = vld [vmem:[#allocation10 + $0x68] sm:$0xff]
    %v1288 = vld [vmem:[#allocation10 + $0x70] sm:$0xff]
    %v1289 = vld [vmem:[#allocation10 + $0x78] sm:$0xff]
    %v1290 = vld [vmem:[#allocation10 + $0x80] sm:$0xff]
    %v1291 = vld [vmem:[#allocation10 + $0x88] sm:$0xff]
    %v1292 = vld [vmem:[#allocation10 + $0x90] sm:$0xff]
    %v1293 = vld [vmem:[#allocation10 + $0x98] sm:$0xff]
    %v1294 = vld [vmem:[#allocation10 + $0xa0] sm:$0xff]
    %v1295 = vld [vmem:[#allocation10 + $0xa8] sm:$0xff]
    %v1296 = vld [vmem:[#allocation10 + $0xb0] sm:$0xff]
    %v1297 = vld [vmem:[#allocation10 + $0xb8] sm:$0xff]
    %v1298 = vld [vmem:[#allocation10 + $0xc0] sm:$0xff]
    %v1299 = vld [vmem:[#allocation10 + $0xc8] sm:$0xff]
    %v1300 = vld [vmem:[#allocation10 + $0xd0] sm:$0xff]
    %v1301 = vld [vmem:[#allocation10 + $0xd8] sm:$0xff]
    %v1302 = vld [vmem:[#allocation10 + $0xe0] sm:$0xff]
    %v1303 = vld [vmem:[#allocation10 + $0xe8] sm:$0xff]
    %v1304 = vld [vmem:[#allocation10 + $0xf0] sm:$0xff]
    %v1305 = vld [vmem:[#allocation10 + $0xf8] sm:$0xff]
    %v1306 = vld [vmem:[#allocation10 + $0x100] sm:$0xff]
    %v1307 = vld [vmem:[#allocation10 + $0x108] sm:$0xff]
    %v1308 = vld [vmem:[#allocation10 + $0x110] sm:$0xff]
    %v1309 = vld [vmem:[#allocation10 + $0x118] sm:$0xff]
    %v1310 = vld [vmem:[#allocation10 + $0x120] sm:$0xff]
    %v1311 = vld [vmem:[#allocation10 + $0x128] sm:$0xff]
    %v1312 = vld [vmem:[#allocation10 + $0x130] sm:$0xff]
    %v1313 = vld [vmem:[#allocation10 + $0x138] sm:$0xff]
    %v1314 = vld [vmem:[#allocation10 + $0x140] sm:$0xff]
    %v1315 = vld [vmem:[#allocation10 + $0x148] sm:$0xff]
    %v1316 = vld [vmem:[#allocation10 + $0x150] sm:$0xff]
    %v1317 = vld [vmem:[#allocation10 + $0x158] sm:$0xff]
    %v1318 = vld [vmem:[#allocation10 + $0x160] sm:$0xff]
    %v1319 = vld [vmem:[#allocation10 + $0x168] sm:$0xff]
    %v1320 = vld [vmem:[#allocation10 + $0x170] sm:$0xff]
    %v1321 = vld [vmem:[#allocation10 + $0x178] sm:$0xff]
    %v1322 = vld [vmem:[#allocation10 + $0x180] sm:$0xff]
    %v1323 = vld [vmem:[#allocation10 + $0x188] sm:$0xff]
    %v1324 = vld [vmem:[#allocation10 + $0x190] sm:$0xff]
    %v1325 = vld [vmem:[#allocation10 + $0x198] sm:$0xff]
    %v1326 = vld [vmem:[#allocation10 + $0x1a0] sm:$0xff]
    %v1327 = vld [vmem:[#allocation10 + $0x1a8] sm:$0xff]
    %v1328 = vld [vmem:[#allocation10 + $0x1b0] sm:$0xff]
    %v1329 = vld [vmem:[#allocation10 + $0x1b8] sm:$0xff]
    %v1330 = vld [vmem:[#allocation10 + $0x1c0] sm:$0xff]
    %v1331 = vld [vmem:[#allocation10 + $0x1c8] sm:$0xff]
    %v1332 = vld [vmem:[#allocation10 + $0x1d0] sm:$0xff]
    %v1333 = vld [vmem:[#allocation10 + $0x1d8] sm:$0xff]
    %v1334 = vld [vmem:[#allocation10 + $0x1e0] sm:$0xff]
    %v1335 = vld [vmem:[#allocation10 + $0x1e8] sm:$0xff]
    %v1336 = vld [vmem:[#allocation10 + $0x1f0] sm:$0xff]
    %v1337 = vld [vmem:[#allocation10 + $0x1f8] sm:$0xff]
    %v1338 = vld [vmem:[#allocation10 + $0x200] sm:$0xff]
    %v1339 = vld [vmem:[#allocation10 + $0x208] sm:$0xff]
    %v1340 = vld [vmem:[#allocation10 + $0x210] sm:$0xff]
    %v1341 = vld [vmem:[#allocation10 + $0x218] sm:$0xff]
    %v1342 = vld [vmem:[#allocation10 + $0x220] sm:$0xff]
    %v1343 = vld [vmem:[#allocation10 + $0x228] sm:$0xff]
    %v1344 = vld [vmem:[#allocation10 + $0x230] sm:$0xff]
    %v1345 = vld [vmem:[#allocation10 + $0x238] sm:$0xff]
    %v1346 = vld [vmem:[#allocation10 + $0x240] sm:$0xff]
    %v1347 = vld [vmem:[#allocation10 + $0x248] sm:$0xff]
    %v1348 = vld [vmem:[#allocation10 + $0x250] sm:$0xff]
    %v1349 = vld [vmem:[#allocation10 + $0x258] sm:$0xff]
    %v1350 = vld [vmem:[#allocation10 + $0x260] sm:$0xff]
    %v1351 = vld [vmem:[#allocation10 + $0x268] sm:$0xff]
    %v1352 = vld [vmem:[#allocation10 + $0x270] sm:$0xff]
    %v1353 = vld [vmem:[#allocation10 + $0x278] sm:$0xff]
    %v1354 = vld [vmem:[#allocation10 + $0x280] sm:$0xff]
    %v1355 = vld [vmem:[#allocation10 + $0x288] sm:$0xff]
    %v1356 = vld [vmem:[#allocation10 + $0x290] sm:$0xff]
    %v1357 = vld [vmem:[#allocation10 + $0x298] sm:$0xff]
    %v1358 = vld [vmem:[#allocation10 + $0x2a0] sm:$0xff]
    %v1359 = vld [vmem:[#allocation10 + $0x2a8] sm:$0xff]
    %v1360 = vld [vmem:[#allocation10 + $0x2b0] sm:$0xff]
    %v1361 = vld [vmem:[#allocation10 + $0x2b8] sm:$0xff]
    %v1362 = vld [vmem:[#allocation10 + $0x2c0] sm:$0xff]
    %v1363 = vld [vmem:[#allocation10 + $0x2c8] sm:$0xff]
    %v1364 = vld [vmem:[#allocation10 + $0x2d0] sm:$0xff]
    %v1365 = vld [vmem:[#allocation10 + $0x2d8] sm:$0xff]
    %v1366 = vld [vmem:[#allocation10 + $0x2e0] sm:$0xff]
    %v1367 = vld [vmem:[#allocation10 + $0x2e8] sm:$0xff]
    %v1368 = vld [vmem:[#allocation10 + $0x2f0] sm:$0xff]
    %v1369 = vld [vmem:[#allocation10 + $0x2f8] sm:$0xff]
    %v1370 = vld [vmem:[#allocation10 + $0x300] sm:$0xff]
    %v1371 = vld [vmem:[#allocation10 + $0x308] sm:$0xff]
    %v1372 = vld [vmem:[#allocation10 + $0x310] sm:$0xff]
    %v1373 = vld [vmem:[#allocation10 + $0x318] sm:$0xff]
    %v1374 = vld [vmem:[#allocation10 + $0x320] sm:$0xff]
    %v1375 = vld [vmem:[#allocation10 + $0x328] sm:$0xff]
    %v1376 = vld [vmem:[#allocation10 + $0x330] sm:$0xff]
    %v1377 = vld [vmem:[#allocation10 + $0x338] sm:$0xff]
    %v1378 = vld [vmem:[#allocation10 + $0x340] sm:$0xff]
    %v1379 = vld [vmem:[#allocation10 + $0x348] sm:$0xff]
    %v1380 = vld [vmem:[#allocation10 + $0x350] sm:$0xff]
    %v1381 = vld [vmem:[#allocation10 + $0x358] sm:$0xff]
    %v1382 = vld [vmem:[#allocation10 + $0x360] sm:$0xff]
    %v1383 = vld [vmem:[#allocation10 + $0x368] sm:$0xff]
    %v1384 = vld [vmem:[#allocation10 + $0x370] sm:$0xff]
    %v1385 = vld [vmem:[#allocation10 + $0x378] sm:$0xff]
    %v1386 = vld [vmem:[#allocation10 + $0x380] sm:$0xff]
    %v1387 = vld [vmem:[#allocation10 + $0x388] sm:$0xff]
    %v1388 = vld [vmem:[#allocation10 + $0x390] sm:$0xff]
    %v1389 = vld [vmem:[#allocation10 + $0x398] sm:$0xff]
    %v1390 = vld [vmem:[#allocation10 + $0x3a0] sm:$0xff]
    %v1391 = vld [vmem:[#allocation10 + $0x3a8] sm:$0xff]
    %v1392 = vld [vmem:[#allocation10 + $0x3b0] sm:$0xff]
    %v1393 = vld [vmem:[#allocation10 + $0x3b8] sm:$0xff]
    %v1394 = vld [vmem:[#allocation10 + $0x3c0] sm:$0xff]
    %v1395 = vld [vmem:[#allocation10 + $0x3c8] sm:$0xff]
    %v1396 = vld [vmem:[#allocation10 + $0x3d0] sm:$0xff]
    %v1397 = vld [vmem:[#allocation10 + $0x3d8] sm:$0xff]
    %v1398 = vld [vmem:[#allocation10 + $0x3e0] sm:$0xff]
    %v1399 = vld [vmem:[#allocation10 + $0x3e8] sm:$0xff]
    %v1400 = vld [vmem:[#allocation10 + $0x3f0] sm:$0xff]
    %v1401 = vld [vmem:[#allocation10 + $0x3f8] sm:$0xff]
    %v1530 = vunpack.c.l.b16 %v1274
    %v1531 = vunpack.c.h.b16 %v1274
    %v1532 = vunpack.c.l.b16 %v1275
    %v1533 = vunpack.c.h.b16 %v1275
    %v1534 = vunpack.c.l.b16 %v1276
    %v1535 = vunpack.c.h.b16 %v1276
    %v1536 = vunpack.c.l.b16 %v1277
    %v1537 = vunpack.c.h.b16 %v1277
    %v1538 = vunpack.c.l.b16 %v1278
    %v1539 = vunpack.c.h.b16 %v1278
    %v1540 = vunpack.c.l.b16 %v1279
    %v1541 = vunpack.c.h.b16 %v1279
    %v1542 = vunpack.c.l.b16 %v1280
    %v1543 = vunpack.c.h.b16 %v1280
    %v1544 = vunpack.c.l.b16 %v1281
    %v1545 = vunpack.c.h.b16 %v1281
    %v1546 = vunpack.c.l.b16 %v1282
    %v1547 = vunpack.c.h.b16 %v1282
    %v1548 = vunpack.c.l.b16 %v1283
    %v1549 = vunpack.c.h.b16 %v1283
    %v1550 = vunpack.c.l.b16 %v1284
    %v1551 = vunpack.c.h.b16 %v1284
    %v1552 = vunpack.c.l.b16 %v1285
    %v1553 = vunpack.c.h.b16 %v1285
    %v1554 = vunpack.c.l.b16 %v1286
    %v1555 = vunpack.c.h.b16 %v1286
    %v1556 = vunpack.c.l.b16 %v1287
    %v1557 = vunpack.c.h.b16 %v1287
    %v1558 = vunpack.c.l.b16 %v1288
    %v1559 = vunpack.c.h.b16 %v1288
    %v1560 = vunpack.c.l.b16 %v1289
    %v1561 = vunpack.c.h.b16 %v1289
    %v1562 = vunpack.c.l.b16 %v1290
    %v1563 = vunpack.c.h.b16 %v1290
    %v1564 = vunpack.c.l.b16 %v1291
    %v1565 = vunpack.c.h.b16 %v1291
    %v1566 = vunpack.c.l.b16 %v1292
    %v1567 = vunpack.c.h.b16 %v1292
    %v1568 = vunpack.c.l.b16 %v1293
    %v1569 = vunpack.c.h.b16 %v1293
    %v1570 = vunpack.c.l.b16 %v1294
    %v1571 = vunpack.c.h.b16 %v1294
    %v1572 = vunpack.c.l.b16 %v1295
    %v1573 = vunpack.c.h.b16 %v1295
    %v1574 = vunpack.c.l.b16 %v1296
    %v1575 = vunpack.c.h.b16 %v1296
    %v1576 = vunpack.c.l.b16 %v1297
    %v1577 = vunpack.c.h.b16 %v1297
    %v1578 = vunpack.c.l.b16 %v1298
    %v1579 = vunpack.c.h.b16 %v1298
    %v1580 = vunpack.c.l.b16 %v1299
    %v1581 = vunpack.c.h.b16 %v1299
    %v1582 = vunpack.c.l.b16 %v1300
    %v1583 = vunpack.c.h.b16 %v1300
    %v1584 = vunpack.c.l.b16 %v1301
    %v1585 = vunpack.c.h.b16 %v1301
    %v1586 = vunpack.c.l.b16 %v1302
    %v1587 = vunpack.c.h.b16 %v1302
    %v1588 = vunpack.c.l.b16 %v1303
    %v1589 = vunpack.c.h.b16 %v1303
    %v1590 = vunpack.c.l.b16 %v1304
    %v1591 = vunpack.c.h.b16 %v1304
    %v1592 = vunpack.c.l.b16 %v1305
    %v1593 = vunpack.c.h.b16 %v1305
    %v1594 = vunpack.c.l.b16 %v1306
    %v1595 = vunpack.c.h.b16 %v1306
    %v1596 = vunpack.c.l.b16 %v1307
    %v1597 = vunpack.c.h.b16 %v1307
    %v1598 = vunpack.c.l.b16 %v1308
    %v1599 = vunpack.c.h.b16 %v1308
    %v1600 = vunpack.c.l.b16 %v1309
    %v1601 = vunpack.c.h.b16 %v1309
    %v1602 = vunpack.c.l.b16 %v1310
    %v1603 = vunpack.c.h.b16 %v1310
    %v1604 = vunpack.c.l.b16 %v1311
    %v1605 = vunpack.c.h.b16 %v1311
    %v1606 = vunpack.c.l.b16 %v1312
    %v1607 = vunpack.c.h.b16 %v1312
    %v1608 = vunpack.c.l.b16 %v1313
    %v1609 = vunpack.c.h.b16 %v1313
    %v1610 = vunpack.c.l.b16 %v1314
    %v1611 = vunpack.c.h.b16 %v1314
    %v1612 = vunpack.c.l.b16 %v1315
    %v1613 = vunpack.c.h.b16 %v1315
    %v1614 = vunpack.c.l.b16 %v1316
    %v1615 = vunpack.c.h.b16 %v1316
    %v1616 = vunpack.c.l.b16 %v1317
    %v1617 = vunpack.c.h.b16 %v1317
    %v1618 = vunpack.c.l.b16 %v1318
    %v1619 = vunpack.c.h.b16 %v1318
    %v1620 = vunpack.c.l.b16 %v1319
    %v1621 = vunpack.c.h.b16 %v1319
    %v1622 = vunpack.c.l.b16 %v1320
    %v1623 = vunpack.c.h.b16 %v1320
    %v1624 = vunpack.c.l.b16 %v1321
    %v1625 = vunpack.c.h.b16 %v1321
    %v1626 = vunpack.c.l.b16 %v1322
    %v1627 = vunpack.c.h.b16 %v1322
    %v1628 = vunpack.c.l.b16 %v1323
    %v1629 = vunpack.c.h.b16 %v1323
    %v1630 = vunpack.c.l.b16 %v1324
    %v1631 = vunpack.c.h.b16 %v1324
    %v1632 = vunpack.c.l.b16 %v1325
    %v1633 = vunpack.c.h.b16 %v1325
    %v1634 = vunpack.c.l.b16 %v1326
    %v1635 = vunpack.c.h.b16 %v1326
    %v1636 = vunpack.c.l.b16 %v1327
    %v1637 = vunpack.c.h.b16 %v1327
    %v1638 = vunpack.c.l.b16 %v1328
    %v1639 = vunpack.c.h.b16 %v1328
    %v1640 = vunpack.c.l.b16 %v1329
    %v1641 = vunpack.c.h.b16 %v1329
    %v1642 = vunpack.c.l.b16 %v1330
    %v1643 = vunpack.c.h.b16 %v1330
    %v1644 = vunpack.c.l.b16 %v1331
    %v1645 = vunpack.c.h.b16 %v1331
    %v1646 = vunpack.c.l.b16 %v1332
    %v1647 = vunpack.c.h.b16 %v1332
    %v1648 = vunpack.c.l.b16 %v1333
    %v1649 = vunpack.c.h.b16 %v1333
    %v1650 = vunpack.c.l.b16 %v1334
    %v1651 = vunpack.c.h.b16 %v1334
    %v1652 = vunpack.c.l.b16 %v1335
    %v1653 = vunpack.c.h.b16 %v1335
    %v1654 = vunpack.c.l.b16 %v1336
    %v1655 = vunpack.c.h.b16 %v1336
    %v1656 = vunpack.c.l.b16 %v1337
    %v1657 = vunpack.c.h.b16 %v1337
    %v1658 = vunpack.c.l.b16 %v1338
    %v1659 = vunpack.c.h.b16 %v1338
    %v1660 = vunpack.c.l.b16 %v1339
    %v1661 = vunpack.c.h.b16 %v1339
    %v1662 = vunpack.c.l.b16 %v1340
    %v1663 = vunpack.c.h.b16 %v1340
    %v1664 = vunpack.c.l.b16 %v1341
    %v1665 = vunpack.c.h.b16 %v1341
    %v1666 = vunpack.c.l.b16 %v1342
    %v1667 = vunpack.c.h.b16 %v1342
    %v1668 = vunpack.c.l.b16 %v1343
    %v1669 = vunpack.c.h.b16 %v1343
    %v1670 = vunpack.c.l.b16 %v1344
    %v1671 = vunpack.c.h.b16 %v1344
    %v1672 = vunpack.c.l.b16 %v1345
    %v1673 = vunpack.c.h.b16 %v1345
    %v1674 = vunpack.c.l.b16 %v1346
    %v1675 = vunpack.c.h.b16 %v1346
    %v1676 = vunpack.c.l.b16 %v1347
    %v1677 = vunpack.c.h.b16 %v1347
    %v1678 = vunpack.c.l.b16 %v1348
    %v1679 = vunpack.c.h.b16 %v1348
    %v1680 = vunpack.c.l.b16 %v1349
    %v1681 = vunpack.c.h.b16 %v1349
    %v1682 = vunpack.c.l.b16 %v1350
    %v1683 = vunpack.c.h.b16 %v1350
    %v1684 = vunpack.c.l.b16 %v1351
    %v1685 = vunpack.c.h.b16 %v1351
    %v1686 = vunpack.c.l.b16 %v1352
    %v1687 = vunpack.c.h.b16 %v1352
    %v1688 = vunpack.c.l.b16 %v1353
    %v1689 = vunpack.c.h.b16 %v1353
    %v1690 = vunpack.c.l.b16 %v1354
    %v1691 = vunpack.c.h.b16 %v1354
    %v1692 = vunpack.c.l.b16 %v1355
    %v1693 = vunpack.c.h.b16 %v1355
    %v1694 = vunpack.c.l.b16 %v1356
    %v1695 = vunpack.c.h.b16 %v1356
    %v1696 = vunpack.c.l.b16 %v1357
    %v1697 = vunpack.c.h.b16 %v1357
    %v1698 = vunpack.c.l.b16 %v1358
    %v1699 = vunpack.c.h.b16 %v1358
    %v1700 = vunpack.c.l.b16 %v1359
    %v1701 = vunpack.c.h.b16 %v1359
    %v1702 = vunpack.c.l.b16 %v1360
    %v1703 = vunpack.c.h.b16 %v1360
    %v1704 = vunpack.c.l.b16 %v1361
    %v1705 = vunpack.c.h.b16 %v1361
    %v1706 = vunpack.c.l.b16 %v1362
    %v1707 = vunpack.c.h.b16 %v1362
    %v1708 = vunpack.c.l.b16 %v1363
    %v1709 = vunpack.c.h.b16 %v1363
    %v1710 = vunpack.c.l.b16 %v1364
    %v1711 = vunpack.c.h.b16 %v1364
    %v1712 = vunpack.c.l.b16 %v1365
    %v1713 = vunpack.c.h.b16 %v1365
    %v1714 = vunpack.c.l.b16 %v1366
    %v1715 = vunpack.c.h.b16 %v1366
    %v1716 = vunpack.c.l.b16 %v1367
    %v1717 = vunpack.c.h.b16 %v1367
    %v1718 = vunpack.c.l.b16 %v1368
    %v1719 = vunpack.c.h.b16 %v1368
    %v1720 = vunpack.c.l.b16 %v1369
    %v1721 = vunpack.c.h.b16 %v1369
    %v1722 = vunpack.c.l.b16 %v1370
    %v1723 = vunpack.c.h.b16 %v1370
    %v1724 = vunpack.c.l.b16 %v1371
    %v1725 = vunpack.c.h.b16 %v1371
    %v1726 = vunpack.c.l.b16 %v1372
    %v1727 = vunpack.c.h.b16 %v1372
    %v1728 = vunpack.c.l.b16 %v1373
    %v1729 = vunpack.c.h.b16 %v1373
    %v1730 = vunpack.c.l.b16 %v1374
    %v1731 = vunpack.c.h.b16 %v1374
    %v1732 = vunpack.c.l.b16 %v1375
    %v1733 = vunpack.c.h.b16 %v1375
    %v1734 = vunpack.c.l.b16 %v1376
    %v1735 = vunpack.c.h.b16 %v1376
    %v1736 = vunpack.c.l.b16 %v1377
    %v1737 = vunpack.c.h.b16 %v1377
    %v1738 = vunpack.c.l.b16 %v1378
    %v1739 = vunpack.c.h.b16 %v1378
    %v1740 = vunpack.c.l.b16 %v1379
    %v1741 = vunpack.c.h.b16 %v1379
    %v1742 = vunpack.c.l.b16 %v1380
    %v1743 = vunpack.c.h.b16 %v1380
    %v1744 = vunpack.c.l.b16 %v1381
    %v1745 = vunpack.c.h.b16 %v1381
    %v1746 = vunpack.c.l.b16 %v1382
    %v1747 = vunpack.c.h.b16 %v1382
    %v1748 = vunpack.c.l.b16 %v1383
    %v1749 = vunpack.c.h.b16 %v1383
    %v1750 = vunpack.c.l.b16 %v1384
    %v1751 = vunpack.c.h.b16 %v1384
    %v1752 = vunpack.c.l.b16 %v1385
    %v1753 = vunpack.c.h.b16 %v1385
    %v1754 = vunpack.c.l.b16 %v1386
    %v1755 = vunpack.c.h.b16 %v1386
    %v1756 = vunpack.c.l.b16 %v1387
    %v1757 = vunpack.c.h.b16 %v1387
    %v1758 = vunpack.c.l.b16 %v1388
    %v1759 = vunpack.c.h.b16 %v1388
    %v1760 = vunpack.c.l.b16 %v1389
    %v1761 = vunpack.c.h.b16 %v1389
    %v1762 = vunpack.c.l.b16 %v1390
    %v1763 = vunpack.c.h.b16 %v1390
    %v1764 = vunpack.c.l.b16 %v1391
    %v1765 = vunpack.c.h.b16 %v1391
    %v1766 = vunpack.c.l.b16 %v1392
    %v1767 = vunpack.c.h.b16 %v1392
    %v1768 = vunpack.c.l.b16 %v1393
    %v1769 = vunpack.c.h.b16 %v1393
    %v1770 = vunpack.c.l.b16 %v1394
    %v1771 = vunpack.c.h.b16 %v1394
    %v1772 = vunpack.c.l.b16 %v1395
    %v1773 = vunpack.c.h.b16 %v1395
    %v1774 = vunpack.c.l.b16 %v1396
    %v1775 = vunpack.c.h.b16 %v1396
    %v1776 = vunpack.c.l.b16 %v1397
    %v1777 = vunpack.c.h.b16 %v1397
    %v1778 = vunpack.c.l.b16 %v1398
    %v1779 = vunpack.c.h.b16 %v1398
    %v1780 = vunpack.c.l.b16 %v1399
    %v1781 = vunpack.c.h.b16 %v1399
    %v1782 = vunpack.c.l.b16 %v1400
    %v1783 = vunpack.c.h.b16 %v1400
    %v1784 = vunpack.c.l.b16 %v1401
    %v1785 = vunpack.c.h.b16 %v1401
    %v1786 = vpack.c.b16 %v1532, %v1530
    %v1787 = vpack.c.b16 %v1533, %v1531
    %v1788 = vpack.c.b16 %v1536, %v1534
    %v1789 = vpack.c.b16 %v1537, %v1535
    %v1790 = vpack.c.b16 %v1540, %v1538
    %v1791 = vpack.c.b16 %v1541, %v1539
    %v1792 = vpack.c.b16 %v1544, %v1542
    %v1793 = vpack.c.b16 %v1545, %v1543
    %v1794 = vpack.c.b16 %v1548, %v1546
    %v1795 = vpack.c.b16 %v1549, %v1547
    %v1796 = vpack.c.b16 %v1552, %v1550
    %v1797 = vpack.c.b16 %v1553, %v1551
    %v1798 = vpack.c.b16 %v1556, %v1554
    %v1799 = vpack.c.b16 %v1557, %v1555
    %v1800 = vpack.c.b16 %v1560, %v1558
    %v1801 = vpack.c.b16 %v1561, %v1559
    %v1802 = vpack.c.b16 %v1564, %v1562
    %v1803 = vpack.c.b16 %v1565, %v1563
    %v1804 = vpack.c.b16 %v1568, %v1566
    %v1805 = vpack.c.b16 %v1569, %v1567
    %v1806 = vpack.c.b16 %v1572, %v1570
    %v1807 = vpack.c.b16 %v1573, %v1571
    %v1808 = vpack.c.b16 %v1576, %v1574
    %v1809 = vpack.c.b16 %v1577, %v1575
    %v1810 = vpack.c.b16 %v1580, %v1578
    %v1811 = vpack.c.b16 %v1581, %v1579
    %v1812 = vpack.c.b16 %v1584, %v1582
    %v1813 = vpack.c.b16 %v1585, %v1583
    %v1814 = vpack.c.b16 %v1588, %v1586
    %v1815 = vpack.c.b16 %v1589, %v1587
    %v1816 = vpack.c.b16 %v1592, %v1590
    %v1817 = vpack.c.b16 %v1593, %v1591
    %v1818 = vpack.c.b16 %v1596, %v1594
    %v1819 = vpack.c.b16 %v1597, %v1595
    %v1820 = vpack.c.b16 %v1600, %v1598
    %v1821 = vpack.c.b16 %v1601, %v1599
    %v1822 = vpack.c.b16 %v1604, %v1602
    %v1823 = vpack.c.b16 %v1605, %v1603
    %v1824 = vpack.c.b16 %v1608, %v1606
    %v1825 = vpack.c.b16 %v1609, %v1607
    %v1826 = vpack.c.b16 %v1612, %v1610
    %v1827 = vpack.c.b16 %v1613, %v1611
    %v1828 = vpack.c.b16 %v1616, %v1614
    %v1829 = vpack.c.b16 %v1617, %v1615
    %v1830 = vpack.c.b16 %v1620, %v1618
    %v1831 = vpack.c.b16 %v1621, %v1619
    %v1832 = vpack.c.b16 %v1624, %v1622
    %v1833 = vpack.c.b16 %v1625, %v1623
    %v1834 = vpack.c.b16 %v1628, %v1626
    %v1835 = vpack.c.b16 %v1629, %v1627
    %v1836 = vpack.c.b16 %v1632, %v1630
    %v1837 = vpack.c.b16 %v1633, %v1631
    %v1838 = vpack.c.b16 %v1636, %v1634
    %v1839 = vpack.c.b16 %v1637, %v1635
    %v1840 = vpack.c.b16 %v1640, %v1638
    %v1841 = vpack.c.b16 %v1641, %v1639
    %v1842 = vpack.c.b16 %v1644, %v1642
    %v1843 = vpack.c.b16 %v1645, %v1643
    %v1844 = vpack.c.b16 %v1648, %v1646
    %v1845 = vpack.c.b16 %v1649, %v1647
    %v1846 = vpack.c.b16 %v1652, %v1650
    %v1847 = vpack.c.b16 %v1653, %v1651
    %v1848 = vpack.c.b16 %v1656, %v1654
    %v1849 = vpack.c.b16 %v1657, %v1655
    %v1850 = vpack.c.b16 %v1660, %v1658
    %v1851 = vpack.c.b16 %v1661, %v1659
    %v1852 = vpack.c.b16 %v1664, %v1662
    %v1853 = vpack.c.b16 %v1665, %v1663
    %v1854 = vpack.c.b16 %v1668, %v1666
    %v1855 = vpack.c.b16 %v1669, %v1667
    %v1856 = vpack.c.b16 %v1672, %v1670
    %v1857 = vpack.c.b16 %v1673, %v1671
    %v1858 = vpack.c.b16 %v1676, %v1674
    %v1859 = vpack.c.b16 %v1677, %v1675
    %v1860 = vpack.c.b16 %v1680, %v1678
    %v1861 = vpack.c.b16 %v1681, %v1679
    %v1862 = vpack.c.b16 %v1684, %v1682
    %v1863 = vpack.c.b16 %v1685, %v1683
    %v1864 = vpack.c.b16 %v1688, %v1686
    %v1865 = vpack.c.b16 %v1689, %v1687
    %v1866 = vpack.c.b16 %v1692, %v1690
    %v1867 = vpack.c.b16 %v1693, %v1691
    %v1868 = vpack.c.b16 %v1696, %v1694
    %v1869 = vpack.c.b16 %v1697, %v1695
    %v1870 = vpack.c.b16 %v1700, %v1698
    %v1871 = vpack.c.b16 %v1701, %v1699
    %v1872 = vpack.c.b16 %v1704, %v1702
    %v1873 = vpack.c.b16 %v1705, %v1703
    %v1874 = vpack.c.b16 %v1708, %v1706
    %v1875 = vpack.c.b16 %v1709, %v1707
    %v1876 = vpack.c.b16 %v1712, %v1710
    %v1877 = vpack.c.b16 %v1713, %v1711
    %v1878 = vpack.c.b16 %v1716, %v1714
    %v1879 = vpack.c.b16 %v1717, %v1715
    %v1880 = vpack.c.b16 %v1720, %v1718
    %v1881 = vpack.c.b16 %v1721, %v1719
    %v1882 = vpack.c.b16 %v1724, %v1722
    %v1883 = vpack.c.b16 %v1725, %v1723
    %v1884 = vpack.c.b16 %v1728, %v1726
    %v1885 = vpack.c.b16 %v1729, %v1727
    %v1886 = vpack.c.b16 %v1732, %v1730
    %v1887 = vpack.c.b16 %v1733, %v1731
    %v1888 = vpack.c.b16 %v1736, %v1734
    %v1889 = vpack.c.b16 %v1737, %v1735
    %v1890 = vpack.c.b16 %v1740, %v1738
    %v1891 = vpack.c.b16 %v1741, %v1739
    %v1892 = vpack.c.b16 %v1744, %v1742
    %v1893 = vpack.c.b16 %v1745, %v1743
    %v1894 = vpack.c.b16 %v1748, %v1746
    %v1895 = vpack.c.b16 %v1749, %v1747
    %v1896 = vpack.c.b16 %v1752, %v1750
    %v1897 = vpack.c.b16 %v1753, %v1751
    %v1898 = vpack.c.b16 %v1756, %v1754
    %v1899 = vpack.c.b16 %v1757, %v1755
    %v1900 = vpack.c.b16 %v1760, %v1758
    %v1901 = vpack.c.b16 %v1761, %v1759
    %v1902 = vpack.c.b16 %v1764, %v1762
    %v1903 = vpack.c.b16 %v1765, %v1763
    %v1904 = vpack.c.b16 %v1768, %v1766
    %v1905 = vpack.c.b16 %v1769, %v1767
    %v1906 = vpack.c.b16 %v1772, %v1770
    %v1907 = vpack.c.b16 %v1773, %v1771
    %v1908 = vpack.c.b16 %v1776, %v1774
    %v1909 = vpack.c.b16 %v1777, %v1775
    %v1910 = vpack.c.b16 %v1780, %v1778
    %v1911 = vpack.c.b16 %v1781, %v1779
    %v1912 = vpack.c.b16 %v1784, %v1782
    %v1913 = vpack.c.b16 %v1785, %v1783
    %2042 = vmatpush.bf16.msra.mxu0 %v1800
    %2043 = vmatpush.bf16.msra.mxu0 %v1798
    %2044 = vmatpush.bf16.msra.mxu0 %v1796
    %2045 = vmatpush.bf16.msra.mxu0 %v1794
    %2046 = vmatpush.bf16.msra.mxu0 %v1792
    %2047 = vmatpush.bf16.msra.mxu0 %v1790
    %2048 = vmatpush.bf16.msra.mxu0 %v1788
    %2049 = vmatpush.bf16.msra.mxu0 %v1786
    %2050 = vmatmul.bf16.gmra.mxu0 %v1206
    %v2051 = vpop.f32.mrf.mxu0
    %v2052 = vadd.f32 0.0, %v2051
    %v2053 = vpop.f32.mrf.mxu0
    %v2054 = vadd.f32 0.0, %v2053
    %2055 = vmatmul.bf16.gmra.mxu0 %v1208
    %v2056 = vpop.f32.mrf.mxu0
    %v2057 = vadd.f32 0.0, %v2056
    %v2058 = vpop.f32.mrf.mxu0
    %v2059 = vadd.f32 0.0, %v2058
    %2060 = vdwg.mxu0
    %2061 = vmatpush.bf16.msra.mxu0 %v1816
    %2062 = vmatpush.bf16.msra.mxu0 %v1814
    %2063 = vmatpush.bf16.msra.mxu0 %v1812
    %2064 = vmatpush.bf16.msra.mxu0 %v1810
    %2065 = vmatpush.bf16.msra.mxu0 %v1808
    %2066 = vmatpush.bf16.msra.mxu0 %v1806
    %2067 = vmatpush.bf16.msra.mxu0 %v1804
    %2068 = vmatpush.bf16.msra.mxu0 %v1802
    %2069 = vmatmul.bf16.gmra.mxu0 %v1207
    %v2070 = vpop.f32.mrf.mxu0
    %v2071 = vadd.f32 %v2052, %v2070
    %v2072 = vpop.f32.mrf.mxu0
    %v2073 = vadd.f32 %v2054, %v2072
    %2074 = vmatmul.bf16.gmra.mxu0 %v1209
    %v2075 = vpop.f32.mrf.mxu0
    %v2076 = vadd.f32 %v2057, %v2075
    %v2077 = vpop.f32.mrf.mxu0
    %v2078 = vadd.f32 %v2059, %v2077
    %2079 = vdwg.mxu0
    %2080 = vmatpush.bf16.msra.mxu0 %v1832
    %2081 = vmatpush.bf16.msra.mxu0 %v1830
    %2082 = vmatpush.bf16.msra.mxu0 %v1828
    %2083 = vmatpush.bf16.msra.mxu0 %v1826
    %2084 = vmatpush.bf16.msra.mxu0 %v1824
    %2085 = vmatpush.bf16.msra.mxu0 %v1822
    %2086 = vmatpush.bf16.msra.mxu0 %v1820
    %2087 = vmatpush.bf16.msra.mxu0 %v1818
    %2088 = vmatmul.bf16.gmra.mxu0 %v1226
    %v2089 = vpop.f32.mrf.mxu0
    %v2090 = vadd.f32 %v2071, %v2089
    %v2091 = vpop.f32.mrf.mxu0
    %v2092 = vadd.f32 %v2073, %v2091
    %2093 = vmatmul.bf16.gmra.mxu0 %v1228
    %v2094 = vpop.f32.mrf.mxu0
    %v2095 = vadd.f32 %v2076, %v2094
    %v2096 = vpop.f32.mrf.mxu0
    %v2097 = vadd.f32 %v2078, %v2096
    %2098 = vdwg.mxu0
    %2099 = vmatpush.bf16.msra.mxu0 %v1848
    %2100 = vmatpush.bf16.msra.mxu0 %v1846
    %2101 = vmatpush.bf16.msra.mxu0 %v1844
    %2102 = vmatpush.bf16.msra.mxu0 %v1842
    %2103 = vmatpush.bf16.msra.mxu0 %v1840
    %2104 = vmatpush.bf16.msra.mxu0 %v1838
    %2105 = vmatpush.bf16.msra.mxu0 %v1836
    %2106 = vmatpush.bf16.msra.mxu0 %v1834
    %2107 = vmatmul.bf16.gmra.mxu0 %v1227
    %v2108 = vpop.f32.mrf.mxu0
    %v2109 = vadd.f32 %v2090, %v2108
    %v2110 = vpop.f32.mrf.mxu0
    %v2111 = vadd.f32 %v2092, %v2110
    %2112 = vmatmul.bf16.gmra.mxu0 %v1229
    %v2113 = vpop.f32.mrf.mxu0
    %v2114 = vadd.f32 %v2095, %v2113
    %v2115 = vpop.f32.mrf.mxu0
    %v2116 = vadd.f32 %v2097, %v2115
    %2117 = vdwg.mxu0
    %2118 = vmatpush.bf16.msra.mxu0 %v1864
    %2119 = vmatpush.bf16.msra.mxu0 %v1862
    %2120 = vmatpush.bf16.msra.mxu0 %v1860
    %2121 = vmatpush.bf16.msra.mxu0 %v1858
    %2122 = vmatpush.bf16.msra.mxu0 %v1856
    %2123 = vmatpush.bf16.msra.mxu0 %v1854
    %2124 = vmatpush.bf16.msra.mxu0 %v1852
    %2125 = vmatpush.bf16.msra.mxu0 %v1850
    %2126 = vmatmul.bf16.gmra.mxu0 %v1246
    %v2127 = vpop.f32.mrf.mxu0
    %v2128 = vadd.f32 %v2109, %v2127
    %v2129 = vpop.f32.mrf.mxu0
    %v2130 = vadd.f32 %v2111, %v2129
    %2131 = vmatmul.bf16.gmra.mxu0 %v1248
    %v2132 = vpop.f32.mrf.mxu0
    %v2133 = vadd.f32 %v2114, %v2132
    %v2134 = vpop.f32.mrf.mxu0
    %v2135 = vadd.f32 %v2116, %v2134
    %2136 = vdwg.mxu0
    %2137 = vmatpush.bf16.msra.mxu0 %v1880
    %2138 = vmatpush.bf16.msra.mxu0 %v1878
    %2139 = vmatpush.bf16.msra.mxu0 %v1876
    %2140 = vmatpush.bf16.msra.mxu0 %v1874
    %2141 = vmatpush.bf16.msra.mxu0 %v1872
    %2142 = vmatpush.bf16.msra.mxu0 %v1870
    %2143 = vmatpush.bf16.msra.mxu0 %v1868
    %2144 = vmatpush.bf16.msra.mxu0 %v1866
    %2145 = vmatmul.bf16.gmra.mxu0 %v1247
    %v2146 = vpop.f32.mrf.mxu0
    %v2147 = vadd.f32 %v2128, %v2146
    %v2148 = vpop.f32.mrf.mxu0
    %v2149 = vadd.f32 %v2130, %v2148
    %2150 = vmatmul.bf16.gmra.mxu0 %v1249
    %v2151 = vpop.f32.mrf.mxu0
    %v2152 = vadd.f32 %v2133, %v2151
    %v2153 = vpop.f32.mrf.mxu0
    %v2154 = vadd.f32 %v2135, %v2153
    %2155 = vdwg.mxu0
    %2156 = vmatpush.bf16.msra.mxu0 %v1896
    %2157 = vmatpush.bf16.msra.mxu0 %v1894
    %2158 = vmatpush.bf16.msra.mxu0 %v1892
    %2159 = vmatpush.bf16.msra.mxu0 %v1890
    %2160 = vmatpush.bf16.msra.mxu0 %v1888
    %2161 = vmatpush.bf16.msra.mxu0 %v1886
    %2162 = vmatpush.bf16.msra.mxu0 %v1884
    %2163 = vmatpush.bf16.msra.mxu0 %v1882
    %2164 = vmatmul.bf16.gmra.mxu0 %v1266
    %v2165 = vpop.f32.mrf.mxu0
    %v2166 = vadd.f32 %v2147, %v2165
    %v2167 = vpop.f32.mrf.mxu0
    %v2168 = vadd.f32 %v2149, %v2167
    %2169 = vmatmul.bf16.gmra.mxu0 %v1268
    %v2170 = vpop.f32.mrf.mxu0
    %v2171 = vadd.f32 %v2152, %v2170
    %v2172 = vpop.f32.mrf.mxu0
    %v2173 = vadd.f32 %v2154, %v2172
    %2174 = vdwg.mxu0
    %2175 = vmatpush.bf16.msra.mxu0 %v1912
    %2176 = vmatpush.bf16.msra.mxu0 %v1910
    %2177 = vmatpush.bf16.msra.mxu0 %v1908
    %2178 = vmatpush.bf16.msra.mxu0 %v1906
    %2179 = vmatpush.bf16.msra.mxu0 %v1904
    %2180 = vmatpush.bf16.msra.mxu0 %v1902
    %2181 = vmatpush.bf16.msra.mxu0 %v1900
    %2182 = vmatpush.bf16.msra.mxu0 %v1898
    %2183 = vmatmul.bf16.gmra.mxu0 %v1267
    %v2184 = vpop.f32.mrf.mxu0
    %v2185 = vadd.f32 %v2166, %v2184
    %v2186 = vpop.f32.mrf.mxu0
    %v2187 = vadd.f32 %v2168, %v2186
    %2188 = vmatmul.bf16.gmra.mxu0 %v1269
    %v2189 = vpop.f32.mrf.mxu0
    %v2190 = vadd.f32 %v2171, %v2189
    %v2191 = vpop.f32.mrf.mxu0
    %v2192 = vadd.f32 %v2173, %v2191
    %2193 = vdwg.mxu0
    %2194 = vmatpush.bf16.msra.mxu0 %v1801
    %2195 = vmatpush.bf16.msra.mxu0 %v1799
    %2196 = vmatpush.bf16.msra.mxu0 %v1797
    %2197 = vmatpush.bf16.msra.mxu0 %v1795
    %2198 = vmatpush.bf16.msra.mxu0 %v1793
    %2199 = vmatpush.bf16.msra.mxu0 %v1791
    %2200 = vmatpush.bf16.msra.mxu0 %v1789
    %2201 = vmatpush.bf16.msra.mxu0 %v1787
    %2202 = vmatmul.bf16.gmra.mxu0 %v1206
    %v2203 = vpop.f32.mrf.mxu0
    %v2204 = vadd.f32 0.0, %v2203
    %v2205 = vpop.f32.mrf.mxu0
    %v2206 = vadd.f32 0.0, %v2205
    %2207 = vmatmul.bf16.gmra.mxu0 %v1208
    %v2208 = vpop.f32.mrf.mxu0
    %v2209 = vadd.f32 0.0, %v2208
    %v2210 = vpop.f32.mrf.mxu0
    %v2211 = vadd.f32 0.0, %v2210
    %2212 = vdwg.mxu0
    %2213 = vmatpush.bf16.msra.mxu0 %v1817
    %2214 = vmatpush.bf16.msra.mxu0 %v1815
    %2215 = vmatpush.bf16.msra.mxu0 %v1813
    %2216 = vmatpush.bf16.msra.mxu0 %v1811
    %2217 = vmatpush.bf16.msra.mxu0 %v1809
    %2218 = vmatpush.bf16.msra.mxu0 %v1807
    %2219 = vmatpush.bf16.msra.mxu0 %v1805
    %2220 = vmatpush.bf16.msra.mxu0 %v1803
    %2221 = vmatmul.bf16.gmra.mxu0 %v1207
    %v2222 = vpop.f32.mrf.mxu0
    %v2223 = vadd.f32 %v2204, %v2222
    %v2224 = vpop.f32.mrf.mxu0
    %v2225 = vadd.f32 %v2206, %v2224
    %2226 = vmatmul.bf16.gmra.mxu0 %v1209
    %v2227 = vpop.f32.mrf.mxu0
    %v2228 = vadd.f32 %v2209, %v2227
    %v2229 = vpop.f32.mrf.mxu0
    %v2230 = vadd.f32 %v2211, %v2229
    %2231 = vdwg.mxu0
    %2232 = vmatpush.bf16.msra.mxu0 %v1833
    %2233 = vmatpush.bf16.msra.mxu0 %v1831
    %2234 = vmatpush.bf16.msra.mxu0 %v1829
    %2235 = vmatpush.bf16.msra.mxu0 %v1827
    %2236 = vmatpush.bf16.msra.mxu0 %v1825
    %2237 = vmatpush.bf16.msra.mxu0 %v1823
    %2238 = vmatpush.bf16.msra.mxu0 %v1821
    %2239 = vmatpush.bf16.msra.mxu0 %v1819
    %2240 = vmatmul.bf16.gmra.mxu0 %v1226
    %v2241 = vpop.f32.mrf.mxu0
    %v2242 = vadd.f32 %v2223, %v2241
    %v2243 = vpop.f32.mrf.mxu0
    %v2244 = vadd.f32 %v2225, %v2243
    %2245 = vmatmul.bf16.gmra.mxu0 %v1228
    %v2246 = vpop.f32.mrf.mxu0
    %v2247 = vadd.f32 %v2228, %v2246
    %v2248 = vpop.f32.mrf.mxu0
    %v2249 = vadd.f32 %v2230, %v2248
    %2250 = vdwg.mxu0
    %2251 = vmatpush.bf16.msra.mxu0 %v1849
    %2252 = vmatpush.bf16.msra.mxu0 %v1847
    %2253 = vmatpush.bf16.msra.mxu0 %v1845
    %2254 = vmatpush.bf16.msra.mxu0 %v1843
    %2255 = vmatpush.bf16.msra.mxu0 %v1841
    %2256 = vmatpush.bf16.msra.mxu0 %v1839
    %2257 = vmatpush.bf16.msra.mxu0 %v1837
    %2258 = vmatpush.bf16.msra.mxu0 %v1835
    %2259 = vmatmul.bf16.gmra.mxu0 %v1227
    %v2260 = vpop.f32.mrf.mxu0
    %v2261 = vadd.f32 %v2242, %v2260
    %v2262 = vpop.f32.mrf.mxu0
    %v2263 = vadd.f32 %v2244, %v2262
    %2264 = vmatmul.bf16.gmra.mxu0 %v1229
    %v2265 = vpop.f32.mrf.mxu0
    %v2266 = vadd.f32 %v2247, %v2265
    %v2267 = vpop.f32.mrf.mxu0
    %v2268 = vadd.f32 %v2249, %v2267
    %2269 = vdwg.mxu0
    %2270 = vmatpush.bf16.msra.mxu0 %v1865
    %2271 = vmatpush.bf16.msra.mxu0 %v1863
    %2272 = vmatpush.bf16.msra.mxu0 %v1861
    %2273 = vmatpush.bf16.msra.mxu0 %v1859
    %2274 = vmatpush.bf16.msra.mxu0 %v1857
    %2275 = vmatpush.bf16.msra.mxu0 %v1855
    %2276 = vmatpush.bf16.msra.mxu0 %v1853
    %2277 = vmatpush.bf16.msra.mxu0 %v1851
    %2278 = vmatmul.bf16.gmra.mxu0 %v1246
    %v2279 = vpop.f32.mrf.mxu0
    %v2280 = vadd.f32 %v2261, %v2279
    %v2281 = vpop.f32.mrf.mxu0
    %v2282 = vadd.f32 %v2263, %v2281
    %2283 = vmatmul.bf16.gmra.mxu0 %v1248
    %v2284 = vpop.f32.mrf.mxu0
    %v2285 = vadd.f32 %v2266, %v2284
    %v2286 = vpop.f32.mrf.mxu0
    %v2287 = vadd.f32 %v2268, %v2286
    %2288 = vdwg.mxu0
    %2289 = vmatpush.bf16.msra.mxu0 %v1881
    %2290 = vmatpush.bf16.msra.mxu0 %v1879
    %2291 = vmatpush.bf16.msra.mxu0 %v1877
    %2292 = vmatpush.bf16.msra.mxu0 %v1875
    %2293 = vmatpush.bf16.msra.mxu0 %v1873
    %2294 = vmatpush.bf16.msra.mxu0 %v1871
    %2295 = vmatpush.bf16.msra.mxu0 %v1869
    %2296 = vmatpush.bf16.msra.mxu0 %v1867
    %2297 = vmatmul.bf16.gmra.mxu0 %v1247
    %v2298 = vpop.f32.mrf.mxu0
    %v2299 = vadd.f32 %v2280, %v2298
    %v2300 = vpop.f32.mrf.mxu0
    %v2301 = vadd.f32 %v2282, %v2300
    %2302 = vmatmul.bf16.gmra.mxu0 %v1249
    %v2303 = vpop.f32.mrf.mxu0
    %v2304 = vadd.f32 %v2285, %v2303
    %v2305 = vpop.f32.mrf.mxu0
    %v2306 = vadd.f32 %v2287, %v2305
    %2307 = vdwg.mxu0
    %2308 = vmatpush.bf16.msra.mxu0 %v1897
    %2309 = vmatpush.bf16.msra.mxu0 %v1895
    %2310 = vmatpush.bf16.msra.mxu0 %v1893
    %2311 = vmatpush.bf16.msra.mxu0 %v1891
    %2312 = vmatpush.bf16.msra.mxu0 %v1889
    %2313 = vmatpush.bf16.msra.mxu0 %v1887
    %2314 = vmatpush.bf16.msra.mxu0 %v1885
    %2315 = vmatpush.bf16.msra.mxu0 %v1883
    %2316 = vmatmul.bf16.gmra.mxu0 %v1266
    %v2317 = vpop.f32.mrf.mxu0
    %v2318 = vadd.f32 %v2299, %v2317
    %v2319 = vpop.f32.mrf.mxu0
    %v2320 = vadd.f32 %v2301, %v2319
    %2321 = vmatmul.bf16.gmra.mxu0 %v1268
    %v2322 = vpop.f32.mrf.mxu0
    %v2323 = vadd.f32 %v2304, %v2322
    %v2324 = vpop.f32.mrf.mxu0
    %v2325 = vadd.f32 %v2306, %v2324
    %2326 = vdwg.mxu0
    %2327 = vmatpush.bf16.msra.mxu0 %v1913
    %2328 = vmatpush.bf16.msra.mxu0 %v1911
    %2329 = vmatpush.bf16.msra.mxu0 %v1909
    %2330 = vmatpush.bf16.msra.mxu0 %v1907
    %2331 = vmatpush.bf16.msra.mxu0 %v1905
    %2332 = vmatpush.bf16.msra.mxu0 %v1903
    %2333 = vmatpush.bf16.msra.mxu0 %v1901
    %2334 = vmatpush.bf16.msra.mxu0 %v1899
    %2335 = vmatmul.bf16.gmra.mxu0 %v1267
    %v2336 = vpop.f32.mrf.mxu0
    %v2337 = vadd.f32 %v2318, %v2336
    %v2338 = vpop.f32.mrf.mxu0
    %v2339 = vadd.f32 %v2320, %v2338
    %2340 = vmatmul.bf16.gmra.mxu0 %v1269
    %v2341 = vpop.f32.mrf.mxu0
    %v2342 = vadd.f32 %v2323, %v2341
    %v2343 = vpop.f32.mrf.mxu0
    %v2344 = vadd.f32 %v2325, %v2343
    %2345 = vdwg.mxu0
    %v2346 = vld [vmem:[%s5] sm:$0x3]
    %v2347 = vld [vmem:[%s6] sm:$0x3]
    %v2348 = vadd.f32 %v2185, %v2187
    %v2349 = vadd.f32 %v2348, %v2190
    %v2350 = vadd.f32 %v2349, %v2192
    %v2351 = vrot.slane %v2350, 4
    %v2352 = vadd.f32 %v2350, %v2351
    %v2353 = vrot.slane %v2352, 2
    %v2354 = vadd.f32 %v2352, %v2353
    %v2355 = vrot.slane %v2354, 1
    %v2356 = vadd.f32 %v2354, %v2355
    %v2357 = vadd.f32 %v2337, %v2339
    %v2358 = vadd.f32 %v2357, %v2342
    %v2359 = vadd.f32 %v2358, %v2344
    %v2360 = vrot.slane %v2359, 4
    %v2361 = vadd.f32 %v2359, %v2360
    %v2362 = vrot.slane %v2361, 2
    %v2363 = vadd.f32 %v2361, %v2362
    %v2364 = vrot.slane %v2363, 1
    %v2365 = vadd.f32 %v2363, %v2364
    %v2366 = vmul.f32 %v2185, %v2185
    %v2367 = vmul.f32 %v2337, %v2337
    %v2368 = vmul.f32 %v2187, %v2187
    %v2369 = vmul.f32 %v2339, %v2339
    %v2370 = vmul.f32 %v2190, %v2190
    %v2371 = vmul.f32 %v2342, %v2342
    %v2372 = vmul.f32 %v2192, %v2192
    %v2373 = vmul.f32 %v2344, %v2344
    %v2374 = vadd.f32 %v2366, %v2368
    %v2375 = vadd.f32 %v2374, %v2370
    %v2376 = vadd.f32 %v2375, %v2372
    %v2377 = vrot.slane %v2376, 4
    %v2378 = vadd.f32 %v2376, %v2377
    %v2379 = vrot.slane %v2378, 2
    %v2380 = vadd.f32 %v2378, %v2379
    %v2381 = vrot.slane %v2380, 1
    %v2382 = vadd.f32 %v2380, %v2381
    %v2383 = vadd.f32 %v2367, %v2369
    %v2384 = vadd.f32 %v2383, %v2371
    %v2385 = vadd.f32 %v2384, %v2373
    %v2386 = vrot.slane %v2385, 4
    %v2387 = vadd.f32 %v2385, %v2386
    %v2388 = vrot.slane %v2387, 2
    %v2389 = vadd.f32 %v2387, %v2388
    %v2390 = vrot.slane %v2389, 1
    %v2391 = vadd.f32 %v2389, %v2390
    %v2392 = vmul.f32 %v2356, 0.03125
    %v2393 = vmul.f32 %v2365, 0.03125
    %v2394 = vmul.f32 %v2382, 0.03125
    %v2395 = vmul.f32 %v2391, 0.03125
    %v2396 = vmul.f32 %v2392, %v2392
    %v2397 = vmul.f32 %v2393, %v2393
    %v2398 = vsub.f32 %v2394, %v2396
    %v2399 = vsub.f32 %v2395, %v2397
    %v2400 = vmax.f32 %v2398, 0.0
    %v2401 = vmax.f32 %v2399, 0.0
    %v2402 = vadd.f32 %v2400, 1e-05
    %v2403 = vadd.f32 %v2401, 1e-05
    %v2404 = vrsqrt.pop %v2402
    %v2405 = vmul.f32 %v2404, %v2402
    %v2406 = vmul.f32 %v2405, %v2404
    %v2407 = vmul.f32 0.5, %v2406
    %v2408 = vsub.f32 1.5, %v2407
    %v2409 = vmul.f32 %v2404, %v2408
    %vm2410 = vweird.f32 %v2402
    %vm2411 = vweird.f32 %v2404
    %vm2412 = vmor %vm2410, %vm2411
    %v2413 = vsel %vm2412, %v2404, %v2409
    %v2414 = vrsqrt.pop %v2403
    %v2415 = vmul.f32 %v2414, %v2403
    %v2416 = vmul.f32 %v2415, %v2414
    %v2417 = vmul.f32 0.5, %v2416
    %v2418 = vsub.f32 1.5, %v2417
    %v2419 = vmul.f32 %v2414, %v2418
    %vm2420 = vweird.f32 %v2403
    %vm2421 = vweird.f32 %v2414
    %vm2422 = vmor %vm2420, %vm2421
    %v2423 = vsel %vm2422, %v2414, %v2419
    %v2426 = vrot.slane %v2423, 7
    %v2427 = vsel %vm746, %v2413, %v2426
    %v2429 = vmul.f32 %v2346, %v2427
    %v2431 = vperm.slane %v2429, 0
    %v2432 = vperm.slane %v2429, 1
    %v2435 = vmul.f32 %v2392, %v2431
    %v2436 = vmul.f32 %v2393, %v2432
    %v2439 = vrot.slane %v2436, 7
    %v2440 = vsel %vm746, %v2435, %v2439
    %v2442 = vsub.f32 %v2347, %v2440
    %v2443 = vmul.f32 %v2185, %v2431
    %v2444 = vmul.f32 %v2337, %v2432
    %v2445 = vmul.f32 %v2187, %v2431
    %v2446 = vmul.f32 %v2339, %v2432
    %v2447 = vmul.f32 %v2190, %v2431
    %v2448 = vmul.f32 %v2342, %v2432
    %v2449 = vmul.f32 %v2192, %v2431
    %v2450 = vmul.f32 %v2344, %v2432
    %v2452 = vperm.slane %v2442, 0
    %v2453 = vperm.slane %v2442, 1
    %v2456 = vadd.f32 %v2443, %v2452
    %v2457 = vadd.f32 %v2444, %v2453
    %v2458 = vadd.f32 %v2445, %v2452
    %v2459 = vadd.f32 %v2446, %v2453
    %v2460 = vadd.f32 %v2447, %v2452
    %v2461 = vadd.f32 %v2448, %v2453
    %v2462 = vadd.f32 %v2449, %v2452
    %v2463 = vadd.f32 %v2450, %v2453
    %v2464 = vmax.f32 %v2456, 0.0
    %v2465 = vmax.f32 %v2457, 0.0
    %v2466 = vmax.f32 %v2458, 0.0
    %v2467 = vmax.f32 %v2459, 0.0
    %v2468 = vmax.f32 %v2460, 0.0
    %v2469 = vmax.f32 %v2461, 0.0
    %v2470 = vmax.f32 %v2462, 0.0
    %v2471 = vmax.f32 %v2463, 0.0
    %v2472 = vpack.c.bf16 %v2466, %v2464
    %v2473 = vpack.c.bf16 %v2467, %v2465
    %v2474 = vpack.c.bf16 %v2470, %v2468
    %v2475 = vpack.c.bf16 %v2471, %v2469
    %v2476 = vld [vmem:[#allocation11] sm:$0xf]
    %v2477 = vld [vmem:[#allocation11 + $0x4] sm:$0xf]
    %v2478 = vld [vmem:[#allocation11 + $0x8] sm:$0xf]
    %v2479 = vld [vmem:[#allocation11 + $0xc] sm:$0xf]
    %v2480 = vld [vmem:[#allocation11 + $0x10] sm:$0xf]
    %v2481 = vld [vmem:[#allocation11 + $0x14] sm:$0xf]
    %v2482 = vld [vmem:[#allocation11 + $0x18] sm:$0xf]
    %v2483 = vld [vmem:[#allocation11 + $0x1c] sm:$0xf]
    %v2484 = vld [vmem:[#allocation11 + $0x20] sm:$0xf]
    %v2485 = vld [vmem:[#allocation11 + $0x24] sm:$0xf]
    %v2486 = vld [vmem:[#allocation11 + $0x28] sm:$0xf]
    %v2487 = vld [vmem:[#allocation11 + $0x2c] sm:$0xf]
    %v2488 = vld [vmem:[#allocation11 + $0x30] sm:$0xf]
    %v2489 = vld [vmem:[#allocation11 + $0x34] sm:$0xf]
    %v2490 = vld [vmem:[#allocation11 + $0x38] sm:$0xf]
    %v2491 = vld [vmem:[#allocation11 + $0x3c] sm:$0xf]
    %v2492 = vld [vmem:[#allocation11 + $0x40] sm:$0xf]
    %v2493 = vld [vmem:[#allocation11 + $0x44] sm:$0xf]
    %v2494 = vld [vmem:[#allocation11 + $0x48] sm:$0xf]
    %v2495 = vld [vmem:[#allocation11 + $0x4c] sm:$0xf]
    %v2496 = vld [vmem:[#allocation11 + $0x50] sm:$0xf]
    %v2497 = vld [vmem:[#allocation11 + $0x54] sm:$0xf]
    %v2498 = vld [vmem:[#allocation11 + $0x58] sm:$0xf]
    %v2499 = vld [vmem:[#allocation11 + $0x5c] sm:$0xf]
    %v2500 = vld [vmem:[#allocation11 + $0x60] sm:$0xf]
    %v2501 = vld [vmem:[#allocation11 + $0x64] sm:$0xf]
    %v2502 = vld [vmem:[#allocation11 + $0x68] sm:$0xf]
    %v2503 = vld [vmem:[#allocation11 + $0x6c] sm:$0xf]
    %v2504 = vld [vmem:[#allocation11 + $0x70] sm:$0xf]
    %v2505 = vld [vmem:[#allocation11 + $0x74] sm:$0xf]
    %v2506 = vld [vmem:[#allocation11 + $0x78] sm:$0xf]
    %v2507 = vld [vmem:[#allocation11 + $0x7c] sm:$0xf]
    %v2508 = vld [vmem:[%s8] sm:$0x1]
    %v2510 = vperm.slane %v2508, 0
    %v2544 = vunpack.c.l.b16 %v2476
    %v2545 = vunpack.c.l.b16 %v2477
    %v2546 = vunpack.c.l.b16 %v2478
    %v2547 = vunpack.c.l.b16 %v2479
    %v2548 = vunpack.c.l.b16 %v2480
    %v2549 = vunpack.c.l.b16 %v2481
    %v2550 = vunpack.c.l.b16 %v2482
    %v2551 = vunpack.c.l.b16 %v2483
    %v2552 = vunpack.c.l.b16 %v2484
    %v2553 = vunpack.c.l.b16 %v2485
    %v2554 = vunpack.c.l.b16 %v2486
    %v2555 = vunpack.c.l.b16 %v2487
    %v2556 = vunpack.c.l.b16 %v2488
    %v2557 = vunpack.c.l.b16 %v2489
    %v2558 = vunpack.c.l.b16 %v2490
    %v2559 = vunpack.c.l.b16 %v2491
    %v2560 = vunpack.c.l.b16 %v2492
    %v2561 = vunpack.c.l.b16 %v2493
    %v2562 = vunpack.c.l.b16 %v2494
    %v2563 = vunpack.c.l.b16 %v2495
    %v2564 = vunpack.c.l.b16 %v2496
    %v2565 = vunpack.c.l.b16 %v2497
    %v2566 = vunpack.c.l.b16 %v2498
    %v2567 = vunpack.c.l.b16 %v2499
    %v2568 = vunpack.c.l.b16 %v2500
    %v2569 = vunpack.c.l.b16 %v2501
    %v2570 = vunpack.c.l.b16 %v2502
    %v2571 = vunpack.c.l.b16 %v2503
    %v2572 = vunpack.c.l.b16 %v2504
    %v2573 = vunpack.c.l.b16 %v2505
    %v2574 = vunpack.c.l.b16 %v2506
    %v2575 = vunpack.c.l.b16 %v2507
    %v2576 = vpack.c.b16 %v2545, %v2544
    %v2577 = vpack.c.b16 %v2547, %v2546
    %v2578 = vpack.c.b16 %v2549, %v2548
    %v2579 = vpack.c.b16 %v2551, %v2550
    %v2580 = vpack.c.b16 %v2553, %v2552
    %v2581 = vpack.c.b16 %v2555, %v2554
    %v2582 = vpack.c.b16 %v2557, %v2556
    %v2583 = vpack.c.b16 %v2559, %v2558
    %v2584 = vpack.c.b16 %v2561, %v2560
    %v2585 = vpack.c.b16 %v2563, %v2562
    %v2586 = vpack.c.b16 %v2565, %v2564
    %v2587 = vpack.c.b16 %v2567, %v2566
    %v2588 = vpack.c.b16 %v2569, %v2568
    %v2589 = vpack.c.b16 %v2571, %v2570
    %v2590 = vpack.c.b16 %v2573, %v2572
    %v2591 = vpack.c.b16 %v2575, %v2574
    %2608 = vmatpush.bf16.msra.mxu0 %v2583
    %2609 = vmatpush.bf16.msra.mxu0 %v2582
    %2610 = vmatpush.bf16.msra.mxu0 %v2581
    %2611 = vmatpush.bf16.msra.mxu0 %v2580
    %2612 = vmatpush.bf16.msra.mxu0 %v2579
    %2613 = vmatpush.bf16.msra.mxu0 %v2578
    %2614 = vmatpush.bf16.msra.mxu0 %v2577
    %2615 = vmatpush.bf16.msra.mxu0 %v2576
    %2616 = vmatmul.bf16.gmra.mxu0 %v2472
    %v2617 = vpop.f32.mrf.mxu0
    %v2618 = vadd.f32 %v2510, %v2617
    %v2619 = vpop.f32.mrf.mxu0
    %v2620 = vadd.f32 %v2510, %v2619
    %2621 = vmatmul.bf16.gmra.mxu0 %v2474
    %v2622 = vpop.f32.mrf.mxu0
    %v2623 = vadd.f32 %v2510, %v2622
    %v2624 = vpop.f32.mrf.mxu0
    %v2625 = vadd.f32 %v2510, %v2624
    %2626 = vdwg.mxu0
    %2627 = vmatpush.bf16.msra.mxu0 %v2591
    %2628 = vmatpush.bf16.msra.mxu0 %v2590
    %2629 = vmatpush.bf16.msra.mxu0 %v2589
    %2630 = vmatpush.bf16.msra.mxu0 %v2588
    %2631 = vmatpush.bf16.msra.mxu0 %v2587
    %2632 = vmatpush.bf16.msra.mxu0 %v2586
    %2633 = vmatpush.bf16.msra.mxu0 %v2585
    %2634 = vmatpush.bf16.msra.mxu0 %v2584
    %2635 = vmatmul.bf16.gmra.mxu0 %v2473
    %v2636 = vpop.f32.mrf.mxu0
    %v2637 = vadd.f32 %v2618, %v2636
    %v2638 = vpop.f32.mrf.mxu0
    %v2639 = vadd.f32 %v2620, %v2638
    %2640 = vmatmul.bf16.gmra.mxu0 %v2475
    %v2641 = vpop.f32.mrf.mxu0
    %v2642 = vadd.f32 %v2623, %v2641
    %v2643 = vpop.f32.mrf.mxu0
    %v2644 = vadd.f32 %v2625, %v2643
    %2645 = vdwg.mxu0
    %2646 = vst [vmem:[#allocation13] sm:$0xff] %v2637
    %2647 = vst [vmem:[#allocation13 + $0x8] sm:$0xff] %v2639
    %2648 = vst [vmem:[#allocation13 + $0x10] sm:$0xff] %v2642
    %2649 = vst [vmem:[#allocation13 + $0x18] sm:$0xff] %v2644
    // Predicated region
    $region62: #{tpu_custom_call.1} parent=1 // pred_check
      _
    $region63: #{tpu_custom_call.1} parent=1 // pred_check_branch
      %2651 = sbr.rel (0) target = $region65
    $region64: #{tpu_custom_call.1} parent=1 // pred_region
      %2653 = vsyncadd [#allocation4], 0
      %s2654 = sshll.u32 [#allocation13], 4
      %s2655 = int_to_ptr.vmem [resolvable:$true] %s2654
      %s2656 = sshll.u32 %s9, 4
      %s2657 = int_to_ptr.hbm [resolvable:$true] %s2656
      %2662 = dma.vmem_to_hbm [thread:$0]  %s2655, 512, %s2657, [#allocation4], 128, 128, 8
    $region65: #{tpu_custom_call.1} parent=1 // pred_fallthru
      _
    // Predicated region
    $region66: #{tpu_custom_call.1} parent=1 // pred_check
      _
    $region67: #{tpu_custom_call.1} parent=1 // pred_check_branch
      %2664 = sbr.rel (0) target = $region69
    $region68: #{tpu_custom_call.1} parent=1 // pred_region
      %2666 = dma.done [#allocation4], 512
    $region69: #{tpu_custom_call.1} parent=1 // pred_fallthru
      _
    %2667 = vsyncpa [#allocation3], 1
    %2668 = vsyncpa [#allocation6], 1
    %2669 = vsyncpa [#allocation9], 1
    %2670 = vsyncpa [#allocation12], 1
    %2671 = vsyncpa [#allocation4], 1

</llo_original>
